<compile_context>
chip_gen: v7x
topology: tpu7x:2x2x1
jax: 0.10.0
libtpu: 0.0.40
codegen_flags: <defaults>
</compile_context>

<pallas_src>
import functools

import jax
import jax.numpy as jnp
from jax.experimental import pallas as pl
from jax.experimental.pallas import tpu as pltpu

EPS = 1e-5  # PyTorch InstanceNorm2d default (affine=False, biased variance)


# --------------------------- Pallas kernel ----------------------------------

def _conv3x3_reflect(x, w_ref, b, masks, H, W):
    """3x3 conv with reflection padding, on a (C, H*W) slab kept in VMEM.

    x:      (Cin, HW) f32, row-major flattened spatial.
    w_ref:  Ref (9, Cout, Cin) bf16, tap-major (tap k = ky*3 + kx).
    b:      (Cout, 1) f32 bias.
    masks:  (col0, colW, row0, rowH) boolean (Cin, HW) boundary masks.
    """
    C, HW = x.shape
    col0, colW, row0, rowH = masks

    # Column-direction neighbours (dx = -1 / +1) with reflection at the
    # left/right image border.  pltpu.roll(x, s, 1)[l] == x[(l - s) mod HW].
    left = pltpu.roll(x, 1, 1)          # value at flat index l-1  (col-1)
    right = pltpu.roll(x, HW - 1, 1)    # value at flat index l+1  (col+1)
    x_m1 = jnp.where(col0, right, left)      # dx = -1 (reflect col -1 -> 1)
    x_p1 = jnp.where(colW, left, right)      # dx = +1 (reflect col W -> W-2)
    col_views = (x_m1, x, x_p1)

    acc = jnp.zeros((w_ref.shape[1], HW), jnp.float32)
    for kx in range(3):                              # dx = kx - 1
        a = col_views[kx]
        up = pltpu.roll(a, W, 1)                     # value at l - W (row-1)
        down = pltpu.roll(a, HW - W, 1)              # value at l + W (row+1)
        row_views = (
            jnp.where(row0, down, up),               # ky = 0, dy = -1
            a,                                       # ky = 1, dy =  0
            jnp.where(rowH, up, down),               # ky = 2, dy = +1
        )
        for ky in range(3):
            k = ky * 3 + kx
            acc = acc + jnp.dot(
                w_ref[k], row_views[ky].astype(jnp.bfloat16),
                preferred_element_type=jnp.float32)
    return acc + b


def _instance_norm(y):
    """Per-row (= per channel of this sample) norm over the lane (HW) axis."""
    inv_hw = 1.0 / y.shape[-1]
    mean = jnp.sum(y, axis=-1, keepdims=True) * inv_hw
    m2 = jnp.sum(y * y, axis=-1, keepdims=True) * inv_hw
    var = m2 - mean * mean                           # one-pass biased variance
    return (y - mean) * jax.lax.rsqrt(var + EPS)


def resnet_block_kernel(x_ref, w1_ref, b1_ref, w2_ref, b2_ref, o_ref, *, H, W):
    C, HW = x_ref.shape
    x = x_ref[...]

    # Boundary masks, built once from a lane iota and reused by both convs.
    lane = jax.lax.broadcasted_iota(jnp.int32, (C, HW), 1)
    if W & (W - 1) == 0:                 # power-of-two width: bit ops only
        col = lane & (W - 1)
    else:
        col = jax.lax.rem(lane, W)
    masks = (col == 0, col == W - 1, lane < W, lane >= HW - W)

    # stage 1: reflect-pad -> conv3x3 -> instance norm -> ReLU  (h stays in VMEM)
    h = jnp.maximum(
        _instance_norm(_conv3x3_reflect(x, w1_ref, b1_ref[...], masks, H, W)),
        0.0)
    # stage 2: reflect-pad -> conv3x3 -> instance norm -> residual add
    y = _instance_norm(_conv3x3_reflect(h, w2_ref, b2_ref[...], masks, H, W))
    o_ref[...] = x + y


# --------------------------- JAX wrapper -------------------------------------

def resnet_block(x, w1, b1, w2, b2):
    """x: (N, C, H, W) f32; w*: (C, C, 3, 3) f32; b*: (C,) f32."""
    N, C, H, W = x.shape
    HW = H * W

    x_slab = x.reshape(N, C, HW)

    def prep_w(w):  # (Cout, Cin, 3, 3) -> tap-major (9, Cout, Cin) bf16
        return jnp.transpose(w, (2, 3, 0, 1)).reshape(9, C, C).astype(jnp.bfloat16)

    slab_spec = pl.BlockSpec((None, C, HW), lambda n: (n, 0, 0))
    w_spec = pl.BlockSpec((9, C, C), lambda n: (0, 0, 0))
    b_spec = pl.BlockSpec((C, 1), lambda n: (0, 0))

    out = pl.pallas_call(
        functools.partial(resnet_block_kernel, H=H, W=W),
        out_shape=jax.ShapeDtypeStruct((N, C, HW), jnp.float32),
        grid=(N,),
        in_specs=[slab_spec, w_spec, b_spec, w_spec, b_spec],
        out_specs=slab_spec,
        compiler_params=pltpu.CompilerParams(
            dimension_semantics=("parallel",)),
    )(x_slab, prep_w(w1), b1.reshape(C, 1), prep_w(w2), b2.reshape(C, 1))

    return out.reshape(N, C, H, W)


# --------------------------- pure-JAX reference ------------------------------

def resnet_block_ref(x, w1, b1, w2, b2):
    # Same bf16 quantization of conv inputs as the kernel (MXU single pass).
    def conv(xx, w, b):
        xp = jnp.pad(xx, ((0, 0), (0, 0), (1, 1), (1, 1)), mode="reflect")
        y = jax.lax.conv_general_dilated(
            xp.astype(jnp.bfloat16), w.astype(jnp.bfloat16),
            window_strides=(1, 1), padding="VALID",
            dimension_numbers=("NCHW", "OIHW", "NCHW"),
            preferred_element_type=jnp.float32)
        return y + b[None, :, None, None]

    def inorm(y):
        m = jnp.mean(y, axis=(2, 3), keepdims=True)
        v = jnp.mean(jnp.square(y - m), axis=(2, 3), keepdims=True)
        return (y - m) * jax.lax.rsqrt(v + EPS)

    h = jnp.maximum(inorm(conv(x, w1, b1)), 0.0)
    return x + inorm(conv(h, w2, b2))


# --------------------------- main ---------------------------------------------

if __name__ == "__main__":
    N, C, H, W = 2, 4, 16, 16  # dim = 4

    key = jax.random.PRNGKey(0)
    kx, kw1, kb1, kw2, kb2 = jax.random.split(key, 5)
    x = jax.random.normal(kx, (N, C, H, W), jnp.float32)
    w1 = jax.random.normal(kw1, (C, C, 3, 3), jnp.float32) * 0.2
    b1 = jax.random.normal(kb1, (C,), jnp.float32) * 0.1
    w2 = jax.random.normal(kw2, (C, C, 3, 3), jnp.float32) * 0.2
    b2 = jax.random.normal(kb2, (C,), jnp.float32) * 0.1

    out = resnet_block(x, w1, b1, w2, b2)
    out = jax.block_until_ready(out)

    ref = resnet_block_ref(x, w1, b1, w2, b2)
    assert out.shape == (N, C, H, W)
    # Tolerance accounts for single-pass bf16 MXU + re-quantization of the
    # in-VMEM intermediate activation between the two conv stages.
    assert jnp.allclose(out, ref, atol=1e-2, rtol=1e-2), (
        f"max abs diff {jnp.max(jnp.abs(out - ref))}")

    print("KERNEL_OK")
</pallas_src>

<mosaic_0001>
module attributes {stable_mosaic.version = 11 : i64} {
  func.func @resnet_block_kernel(%arg0: i32, %arg1: memref<1x4x256xf32, #tpu.memory_space<vmem>>, %arg2: memref<9x4x4xbf16, #tpu.memory_space<vmem>>, %arg3: memref<4x1xf32, #tpu.memory_space<vmem>>, %arg4: memref<9x4x4xbf16, #tpu.memory_space<vmem>>, %arg5: memref<4x1xf32, #tpu.memory_space<vmem>>, %arg6: memref<1x4x256xf32, #tpu.memory_space<vmem>>) attributes {dimension_semantics = [#tpu.dimension_semantics<parallel>], iteration_bounds = array<i64: 2>, scalar_prefetch = 0 : i64, scratch_operands = 0 : i64, tpu.core_type = #tpu.core_type<tc>, window_params = [{transform_indices = @transform_0, window_bounds = array<i64: 1, 4, 256>}, {pipeline_mode = #tpu.pipeline_mode<synchronous>, transform_indices = @transform_1, window_bounds = array<i64: 9, 4, 4>}, {pipeline_mode = #tpu.pipeline_mode<synchronous>, transform_indices = @transform_2, window_bounds = array<i64: 4, 1>}, {pipeline_mode = #tpu.pipeline_mode<synchronous>, transform_indices = @transform_3, window_bounds = array<i64: 9, 4, 4>}, {pipeline_mode = #tpu.pipeline_mode<synchronous>, transform_indices = @transform_4, window_bounds = array<i64: 4, 1>}, {transform_indices = @transform_5, window_bounds = array<i64: 1, 4, 256>}]} {
    %c0 = arith.constant 0 : index
    %c0_0 = arith.constant 0 : index
    %c0_1 = arith.constant 0 : index
    %0 = vector.load %arg1[%c0, %c0_0, %c0_1] : memref<1x4x256xf32, #tpu.memory_space<vmem>>, vector<1x4x256xf32>
    %1 = vector.shape_cast %0 : vector<1x4x256xf32> to vector<4x256xf32>
    %2 = tpu.iota {dimensions = array<i32: 1>} : vector<4x256xi32>
    %c15_i32 = arith.constant 15 : i32
    %3 = vector.broadcast %c15_i32 : i32 to vector<4x256xi32>
    %4 = arith.andi %2, %3 : vector<4x256xi32>
    %c0_i32 = arith.constant 0 : i32
    %5 = vector.broadcast %c0_i32 : i32 to vector<4x256xi32>
    %6 = arith.cmpi eq, %4, %5 : vector<4x256xi32>
    %c15_i32_2 = arith.constant 15 : i32
    %7 = vector.broadcast %c15_i32_2 : i32 to vector<4x256xi32>
    %8 = arith.cmpi eq, %4, %7 : vector<4x256xi32>
    %c16_i32 = arith.constant 16 : i32
    %9 = vector.broadcast %c16_i32 : i32 to vector<4x256xi32>
    %10 = arith.cmpi slt, %2, %9 : vector<4x256xi32>
    %c240_i32 = arith.constant 240 : i32
    %11 = vector.broadcast %c240_i32 : i32 to vector<4x256xi32>
    %12 = arith.cmpi sge, %2, %11 : vector<4x256xi32>
    %c0_3 = arith.constant 0 : index
    %c0_4 = arith.constant 0 : index
    %13 = vector.load %arg3[%c0_3, %c0_4] : memref<4x1xf32, #tpu.memory_space<vmem>>, vector<4x1xf32>
    %c1_i32 = arith.constant 1 : i32
    %14 = tpu.dynamic_rotate %1 by %c1_i32 dim 1 : vector<4x256xf32>, i32 -> vector<4x256xf32>
    %c255_i32 = arith.constant 255 : i32
    %15 = tpu.dynamic_rotate %1 by %c255_i32 dim 1 : vector<4x256xf32>, i32 -> vector<4x256xf32>
    %16 = arith.select %6, %15, %14 : vector<4x256xi1>, vector<4x256xf32>
    %17 = arith.select %8, %14, %15 : vector<4x256xi1>, vector<4x256xf32>
    %cst = arith.constant 0.000000e+00 : f32
    %18 = vector.broadcast %cst : f32 to vector<4x256xf32>
    %c16_i32_5 = arith.constant 16 : i32
    %19 = tpu.dynamic_rotate %16 by %c16_i32_5 dim 1 : vector<4x256xf32>, i32 -> vector<4x256xf32>
    %c240_i32_6 = arith.constant 240 : i32
    %20 = tpu.dynamic_rotate %16 by %c240_i32_6 dim 1 : vector<4x256xf32>, i32 -> vector<4x256xf32>
    %21 = arith.select %10, %20, %19 : vector<4x256xi1>, vector<4x256xf32>
    %22 = arith.select %12, %19, %20 : vector<4x256xi1>, vector<4x256xf32>
    %c0_7 = arith.constant 0 : index
    %c0_8 = arith.constant 0 : index
    %c0_9 = arith.constant 0 : index
    %23 = vector.load %arg2[%c0_7, %c0_8, %c0_9] : memref<9x4x4xbf16, #tpu.memory_space<vmem>>, vector<1x4x4xbf16>
    %24 = vector.shape_cast %23 : vector<1x4x4xbf16> to vector<4x4xbf16>
    %25 = arith.truncf %21 : vector<4x256xf32> to vector<4x256xbf16>
    %cst_10 = arith.constant dense<0.000000e+00> : vector<4x256xf32>
    %26 = tpu.matmul %24, %25, %cst_10 {dimension_numbers = #tpu.dot_dimension_numbers<[1], [0], [0], [1], [0, 0, 1, 1], [], []>} : vector<4x4xbf16>, vector<4x256xbf16>, vector<4x256xf32> -> vector<4x256xf32>
    %27 = arith.addf %18, %26 : vector<4x256xf32>
    %c3 = arith.constant 3 : index
    %c0_11 = arith.constant 0 : index
    %c0_12 = arith.constant 0 : index
    %28 = vector.load %arg2[%c3, %c0_11, %c0_12] : memref<9x4x4xbf16, #tpu.memory_space<vmem>>, vector<1x4x4xbf16>
    %29 = vector.shape_cast %28 : vector<1x4x4xbf16> to vector<4x4xbf16>
    %30 = arith.truncf %16 : vector<4x256xf32> to vector<4x256xbf16>
    %cst_13 = arith.constant dense<0.000000e+00> : vector<4x256xf32>
    %31 = tpu.matmul %29, %30, %cst_13 {dimension_numbers = #tpu.dot_dimension_numbers<[1], [0], [0], [1], [0, 0, 1, 1], [], []>} : vector<4x4xbf16>, vector<4x256xbf16>, vector<4x256xf32> -> vector<4x256xf32>
    %32 = arith.addf %27, %31 : vector<4x256xf32>
    %c6 = arith.constant 6 : index
    %c0_14 = arith.constant 0 : index
    %c0_15 = arith.constant 0 : index
    %33 = vector.load %arg2[%c6, %c0_14, %c0_15] : memref<9x4x4xbf16, #tpu.memory_space<vmem>>, vector<1x4x4xbf16>
    %34 = vector.shape_cast %33 : vector<1x4x4xbf16> to vector<4x4xbf16>
    %35 = arith.truncf %22 : vector<4x256xf32> to vector<4x256xbf16>
    %cst_16 = arith.constant dense<0.000000e+00> : vector<4x256xf32>
    %36 = tpu.matmul %34, %35, %cst_16 {dimension_numbers = #tpu.dot_dimension_numbers<[1], [0], [0], [1], [0, 0, 1, 1], [], []>} : vector<4x4xbf16>, vector<4x256xbf16>, vector<4x256xf32> -> vector<4x256xf32>
    %37 = arith.addf %32, %36 : vector<4x256xf32>
    %c16_i32_17 = arith.constant 16 : i32
    %38 = tpu.dynamic_rotate %1 by %c16_i32_17 dim 1 : vector<4x256xf32>, i32 -> vector<4x256xf32>
    %c240_i32_18 = arith.constant 240 : i32
    %39 = tpu.dynamic_rotate %1 by %c240_i32_18 dim 1 : vector<4x256xf32>, i32 -> vector<4x256xf32>
    %40 = arith.select %10, %39, %38 : vector<4x256xi1>, vector<4x256xf32>
    %41 = arith.select %12, %38, %39 : vector<4x256xi1>, vector<4x256xf32>
    %c1 = arith.constant 1 : index
    %c0_19 = arith.constant 0 : index
    %c0_20 = arith.constant 0 : index
    %42 = vector.load %arg2[%c1, %c0_19, %c0_20] : memref<9x4x4xbf16, #tpu.memory_space<vmem>>, vector<1x4x4xbf16>
    %43 = vector.shape_cast %42 : vector<1x4x4xbf16> to vector<4x4xbf16>
    %44 = arith.truncf %40 : vector<4x256xf32> to vector<4x256xbf16>
    %cst_21 = arith.constant dense<0.000000e+00> : vector<4x256xf32>
    %45 = tpu.matmul %43, %44, %cst_21 {dimension_numbers = #tpu.dot_dimension_numbers<[1], [0], [0], [1], [0, 0, 1, 1], [], []>} : vector<4x4xbf16>, vector<4x256xbf16>, vector<4x256xf32> -> vector<4x256xf32>
    %46 = arith.addf %37, %45 : vector<4x256xf32>
    %c4 = arith.constant 4 : index
    %c0_22 = arith.constant 0 : index
    %c0_23 = arith.constant 0 : index
    %47 = vector.load %arg2[%c4, %c0_22, %c0_23] : memref<9x4x4xbf16, #tpu.memory_space<vmem>>, vector<1x4x4xbf16>
    %48 = vector.shape_cast %47 : vector<1x4x4xbf16> to vector<4x4xbf16>
    %49 = arith.truncf %1 : vector<4x256xf32> to vector<4x256xbf16>
    %cst_24 = arith.constant dense<0.000000e+00> : vector<4x256xf32>
    %50 = tpu.matmul %48, %49, %cst_24 {dimension_numbers = #tpu.dot_dimension_numbers<[1], [0], [0], [1], [0, 0, 1, 1], [], []>} : vector<4x4xbf16>, vector<4x256xbf16>, vector<4x256xf32> -> vector<4x256xf32>
    %51 = arith.addf %46, %50 : vector<4x256xf32>
    %c7 = arith.constant 7 : index
    %c0_25 = arith.constant 0 : index
    %c0_26 = arith.constant 0 : index
    %52 = vector.load %arg2[%c7, %c0_25, %c0_26] : memref<9x4x4xbf16, #tpu.memory_space<vmem>>, vector<1x4x4xbf16>
    %53 = vector.shape_cast %52 : vector<1x4x4xbf16> to vector<4x4xbf16>
    %54 = arith.truncf %41 : vector<4x256xf32> to vector<4x256xbf16>
    %cst_27 = arith.constant dense<0.000000e+00> : vector<4x256xf32>
    %55 = tpu.matmul %53, %54, %cst_27 {dimension_numbers = #tpu.dot_dimension_numbers<[1], [0], [0], [1], [0, 0, 1, 1], [], []>} : vector<4x4xbf16>, vector<4x256xbf16>, vector<4x256xf32> -> vector<4x256xf32>
    %56 = arith.addf %51, %55 : vector<4x256xf32>
    %c16_i32_28 = arith.constant 16 : i32
    %57 = tpu.dynamic_rotate %17 by %c16_i32_28 dim 1 : vector<4x256xf32>, i32 -> vector<4x256xf32>
    %c240_i32_29 = arith.constant 240 : i32
    %58 = tpu.dynamic_rotate %17 by %c240_i32_29 dim 1 : vector<4x256xf32>, i32 -> vector<4x256xf32>
    %59 = arith.select %10, %58, %57 : vector<4x256xi1>, vector<4x256xf32>
    %60 = arith.select %12, %57, %58 : vector<4x256xi1>, vector<4x256xf32>
    %c2 = arith.constant 2 : index
    %c0_30 = arith.constant 0 : index
    %c0_31 = arith.constant 0 : index
    %61 = vector.load %arg2[%c2, %c0_30, %c0_31] : memref<9x4x4xbf16, #tpu.memory_space<vmem>>, vector<1x4x4xbf16>
    %62 = vector.shape_cast %61 : vector<1x4x4xbf16> to vector<4x4xbf16>
    %63 = arith.truncf %59 : vector<4x256xf32> to vector<4x256xbf16>
    %cst_32 = arith.constant dense<0.000000e+00> : vector<4x256xf32>
    %64 = tpu.matmul %62, %63, %cst_32 {dimension_numbers = #tpu.dot_dimension_numbers<[1], [0], [0], [1], [0, 0, 1, 1], [], []>} : vector<4x4xbf16>, vector<4x256xbf16>, vector<4x256xf32> -> vector<4x256xf32>
    %65 = arith.addf %56, %64 : vector<4x256xf32>
    %c5 = arith.constant 5 : index
    %c0_33 = arith.constant 0 : index
    %c0_34 = arith.constant 0 : index
    %66 = vector.load %arg2[%c5, %c0_33, %c0_34] : memref<9x4x4xbf16, #tpu.memory_space<vmem>>, vector<1x4x4xbf16>
    %67 = vector.shape_cast %66 : vector<1x4x4xbf16> to vector<4x4xbf16>
    %68 = arith.truncf %17 : vector<4x256xf32> to vector<4x256xbf16>
    %cst_35 = arith.constant dense<0.000000e+00> : vector<4x256xf32>
    %69 = tpu.matmul %67, %68, %cst_35 {dimension_numbers = #tpu.dot_dimension_numbers<[1], [0], [0], [1], [0, 0, 1, 1], [], []>} : vector<4x4xbf16>, vector<4x256xbf16>, vector<4x256xf32> -> vector<4x256xf32>
    %70 = arith.addf %65, %69 : vector<4x256xf32>
    %c8 = arith.constant 8 : index
    %c0_36 = arith.constant 0 : index
    %c0_37 = arith.constant 0 : index
    %71 = vector.load %arg2[%c8, %c0_36, %c0_37] : memref<9x4x4xbf16, #tpu.memory_space<vmem>>, vector<1x4x4xbf16>
    %72 = vector.shape_cast %71 : vector<1x4x4xbf16> to vector<4x4xbf16>
    %73 = arith.truncf %60 : vector<4x256xf32> to vector<4x256xbf16>
    %cst_38 = arith.constant dense<0.000000e+00> : vector<4x256xf32>
    %74 = tpu.matmul %72, %73, %cst_38 {dimension_numbers = #tpu.dot_dimension_numbers<[1], [0], [0], [1], [0, 0, 1, 1], [], []>} : vector<4x4xbf16>, vector<4x256xbf16>, vector<4x256xf32> -> vector<4x256xf32>
    %75 = arith.addf %70, %74 : vector<4x256xf32>
    %76 = vector.broadcast %13 : vector<4x1xf32> to vector<4x256xf32>
    %77 = arith.addf %75, %76 : vector<4x256xf32>
    %cst_39 = arith.constant dense<0.000000e+00> : vector<4xf32>
    %78 = vector.multi_reduction <add>, %77, %cst_39 [1] : vector<4x256xf32> to vector<4xf32>
    %79 = vector.shape_cast %78 : vector<4xf32> to vector<4x1xf32>
    %cst_40 = arith.constant 3.906250e-03 : f32
    %80 = vector.broadcast %cst_40 : f32 to vector<4x1xf32>
    %81 = arith.mulf %79, %80 : vector<4x1xf32>
    %82 = arith.mulf %77, %77 : vector<4x256xf32>
    %cst_41 = arith.constant dense<0.000000e+00> : vector<4xf32>
    %83 = vector.multi_reduction <add>, %82, %cst_41 [1] : vector<4x256xf32> to vector<4xf32>
    %84 = vector.shape_cast %83 : vector<4xf32> to vector<4x1xf32>
    %cst_42 = arith.constant 3.906250e-03 : f32
    %85 = vector.broadcast %cst_42 : f32 to vector<4x1xf32>
    %86 = arith.mulf %84, %85 : vector<4x1xf32>
    %87 = arith.mulf %81, %81 : vector<4x1xf32>
    %88 = arith.subf %86, %87 : vector<4x1xf32>
    %89 = vector.broadcast %81 : vector<4x1xf32> to vector<4x256xf32>
    %90 = arith.subf %77, %89 : vector<4x256xf32>
    %cst_43 = arith.constant 9.99999974E-6 : f32
    %91 = vector.broadcast %cst_43 : f32 to vector<4x1xf32>
    %92 = arith.addf %88, %91 : vector<4x1xf32>
    %93 = math.rsqrt %92 : vector<4x1xf32>
    %94 = vector.broadcast %93 : vector<4x1xf32> to vector<4x256xf32>
    %95 = arith.mulf %90, %94 : vector<4x256xf32>
    %cst_44 = arith.constant 0.000000e+00 : f32
    %96 = vector.broadcast %cst_44 : f32 to vector<4x256xf32>
    %97 = arith.maximumf %95, %96 : vector<4x256xf32>
    %c0_45 = arith.constant 0 : index
    %c0_46 = arith.constant 0 : index
    %98 = vector.load %arg5[%c0_45, %c0_46] : memref<4x1xf32, #tpu.memory_space<vmem>>, vector<4x1xf32>
    %c1_i32_47 = arith.constant 1 : i32
    %99 = tpu.dynamic_rotate %97 by %c1_i32_47 dim 1 : vector<4x256xf32>, i32 -> vector<4x256xf32>
    %c255_i32_48 = arith.constant 255 : i32
    %100 = tpu.dynamic_rotate %97 by %c255_i32_48 dim 1 : vector<4x256xf32>, i32 -> vector<4x256xf32>
    %101 = arith.select %6, %100, %99 : vector<4x256xi1>, vector<4x256xf32>
    %102 = arith.select %8, %99, %100 : vector<4x256xi1>, vector<4x256xf32>
    %cst_49 = arith.constant 0.000000e+00 : f32
    %103 = vector.broadcast %cst_49 : f32 to vector<4x256xf32>
    %c16_i32_50 = arith.constant 16 : i32
    %104 = tpu.dynamic_rotate %101 by %c16_i32_50 dim 1 : vector<4x256xf32>, i32 -> vector<4x256xf32>
    %c240_i32_51 = arith.constant 240 : i32
    %105 = tpu.dynamic_rotate %101 by %c240_i32_51 dim 1 : vector<4x256xf32>, i32 -> vector<4x256xf32>
    %106 = arith.select %10, %105, %104 : vector<4x256xi1>, vector<4x256xf32>
    %107 = arith.select %12, %104, %105 : vector<4x256xi1>, vector<4x256xf32>
    %c0_52 = arith.constant 0 : index
    %c0_53 = arith.constant 0 : index
    %c0_54 = arith.constant 0 : index
    %108 = vector.load %arg4[%c0_52, %c0_53, %c0_54] : memref<9x4x4xbf16, #tpu.memory_space<vmem>>, vector<1x4x4xbf16>
    %109 = vector.shape_cast %108 : vector<1x4x4xbf16> to vector<4x4xbf16>
    %110 = arith.truncf %106 : vector<4x256xf32> to vector<4x256xbf16>
    %cst_55 = arith.constant dense<0.000000e+00> : vector<4x256xf32>
    %111 = tpu.matmul %109, %110, %cst_55 {dimension_numbers = #tpu.dot_dimension_numbers<[1], [0], [0], [1], [0, 0, 1, 1], [], []>} : vector<4x4xbf16>, vector<4x256xbf16>, vector<4x256xf32> -> vector<4x256xf32>
    %112 = arith.addf %103, %111 : vector<4x256xf32>
    %c3_56 = arith.constant 3 : index
    %c0_57 = arith.constant 0 : index
    %c0_58 = arith.constant 0 : index
    %113 = vector.load %arg4[%c3_56, %c0_57, %c0_58] : memref<9x4x4xbf16, #tpu.memory_space<vmem>>, vector<1x4x4xbf16>
    %114 = vector.shape_cast %113 : vector<1x4x4xbf16> to vector<4x4xbf16>
    %115 = arith.truncf %101 : vector<4x256xf32> to vector<4x256xbf16>
    %cst_59 = arith.constant dense<0.000000e+00> : vector<4x256xf32>
    %116 = tpu.matmul %114, %115, %cst_59 {dimension_numbers = #tpu.dot_dimension_numbers<[1], [0], [0], [1], [0, 0, 1, 1], [], []>} : vector<4x4xbf16>, vector<4x256xbf16>, vector<4x256xf32> -> vector<4x256xf32>
    %117 = arith.addf %112, %116 : vector<4x256xf32>
    %c6_60 = arith.constant 6 : index
    %c0_61 = arith.constant 0 : index
    %c0_62 = arith.constant 0 : index
    %118 = vector.load %arg4[%c6_60, %c0_61, %c0_62] : memref<9x4x4xbf16, #tpu.memory_space<vmem>>, vector<1x4x4xbf16>
    %119 = vector.shape_cast %118 : vector<1x4x4xbf16> to vector<4x4xbf16>
    %120 = arith.truncf %107 : vector<4x256xf32> to vector<4x256xbf16>
    %cst_63 = arith.constant dense<0.000000e+00> : vector<4x256xf32>
    %121 = tpu.matmul %119, %120, %cst_63 {dimension_numbers = #tpu.dot_dimension_numbers<[1], [0], [0], [1], [0, 0, 1, 1], [], []>} : vector<4x4xbf16>, vector<4x256xbf16>, vector<4x256xf32> -> vector<4x256xf32>
    %122 = arith.addf %117, %121 : vector<4x256xf32>
    %c16_i32_64 = arith.constant 16 : i32
    %123 = tpu.dynamic_rotate %97 by %c16_i32_64 dim 1 : vector<4x256xf32>, i32 -> vector<4x256xf32>
    %c240_i32_65 = arith.constant 240 : i32
    %124 = tpu.dynamic_rotate %97 by %c240_i32_65 dim 1 : vector<4x256xf32>, i32 -> vector<4x256xf32>
    %125 = arith.select %10, %124, %123 : vector<4x256xi1>, vector<4x256xf32>
    %126 = arith.select %12, %123, %124 : vector<4x256xi1>, vector<4x256xf32>
    %c1_66 = arith.constant 1 : index
    %c0_67 = arith.constant 0 : index
    %c0_68 = arith.constant 0 : index
    %127 = vector.load %arg4[%c1_66, %c0_67, %c0_68] : memref<9x4x4xbf16, #tpu.memory_space<vmem>>, vector<1x4x4xbf16>
    %128 = vector.shape_cast %127 : vector<1x4x4xbf16> to vector<4x4xbf16>
    %129 = arith.truncf %125 : vector<4x256xf32> to vector<4x256xbf16>
    %cst_69 = arith.constant dense<0.000000e+00> : vector<4x256xf32>
    %130 = tpu.matmul %128, %129, %cst_69 {dimension_numbers = #tpu.dot_dimension_numbers<[1], [0], [0], [1], [0, 0, 1, 1], [], []>} : vector<4x4xbf16>, vector<4x256xbf16>, vector<4x256xf32> -> vector<4x256xf32>
    %131 = arith.addf %122, %130 : vector<4x256xf32>
    %c4_70 = arith.constant 4 : index
    %c0_71 = arith.constant 0 : index
    %c0_72 = arith.constant 0 : index
    %132 = vector.load %arg4[%c4_70, %c0_71, %c0_72] : memref<9x4x4xbf16, #tpu.memory_space<vmem>>, vector<1x4x4xbf16>
    %133 = vector.shape_cast %132 : vector<1x4x4xbf16> to vector<4x4xbf16>
    %134 = arith.truncf %97 : vector<4x256xf32> to vector<4x256xbf16>
    %cst_73 = arith.constant dense<0.000000e+00> : vector<4x256xf32>
    %135 = tpu.matmul %133, %134, %cst_73 {dimension_numbers = #tpu.dot_dimension_numbers<[1], [0], [0], [1], [0, 0, 1, 1], [], []>} : vector<4x4xbf16>, vector<4x256xbf16>, vector<4x256xf32> -> vector<4x256xf32>
    %136 = arith.addf %131, %135 : vector<4x256xf32>
    %c7_74 = arith.constant 7 : index
    %c0_75 = arith.constant 0 : index
    %c0_76 = arith.constant 0 : index
    %137 = vector.load %arg4[%c7_74, %c0_75, %c0_76] : memref<9x4x4xbf16, #tpu.memory_space<vmem>>, vector<1x4x4xbf16>
    %138 = vector.shape_cast %137 : vector<1x4x4xbf16> to vector<4x4xbf16>
    %139 = arith.truncf %126 : vector<4x256xf32> to vector<4x256xbf16>
    %cst_77 = arith.constant dense<0.000000e+00> : vector<4x256xf32>
    %140 = tpu.matmul %138, %139, %cst_77 {dimension_numbers = #tpu.dot_dimension_numbers<[1], [0], [0], [1], [0, 0, 1, 1], [], []>} : vector<4x4xbf16>, vector<4x256xbf16>, vector<4x256xf32> -> vector<4x256xf32>
    %141 = arith.addf %136, %140 : vector<4x256xf32>
    %c16_i32_78 = arith.constant 16 : i32
    %142 = tpu.dynamic_rotate %102 by %c16_i32_78 dim 1 : vector<4x256xf32>, i32 -> vector<4x256xf32>
    %c240_i32_79 = arith.constant 240 : i32
    %143 = tpu.dynamic_rotate %102 by %c240_i32_79 dim 1 : vector<4x256xf32>, i32 -> vector<4x256xf32>
    %144 = arith.select %10, %143, %142 : vector<4x256xi1>, vector<4x256xf32>
    %145 = arith.select %12, %142, %143 : vector<4x256xi1>, vector<4x256xf32>
    %c2_80 = arith.constant 2 : index
    %c0_81 = arith.constant 0 : index
    %c0_82 = arith.constant 0 : index
    %146 = vector.load %arg4[%c2_80, %c0_81, %c0_82] : memref<9x4x4xbf16, #tpu.memory_space<vmem>>, vector<1x4x4xbf16>
    %147 = vector.shape_cast %146 : vector<1x4x4xbf16> to vector<4x4xbf16>
    %148 = arith.truncf %144 : vector<4x256xf32> to vector<4x256xbf16>
    %cst_83 = arith.constant dense<0.000000e+00> : vector<4x256xf32>
    %149 = tpu.matmul %147, %148, %cst_83 {dimension_numbers = #tpu.dot_dimension_numbers<[1], [0], [0], [1], [0, 0, 1, 1], [], []>} : vector<4x4xbf16>, vector<4x256xbf16>, vector<4x256xf32> -> vector<4x256xf32>
    %150 = arith.addf %141, %149 : vector<4x256xf32>
    %c5_84 = arith.constant 5 : index
    %c0_85 = arith.constant 0 : index
    %c0_86 = arith.constant 0 : index
    %151 = vector.load %arg4[%c5_84, %c0_85, %c0_86] : memref<9x4x4xbf16, #tpu.memory_space<vmem>>, vector<1x4x4xbf16>
    %152 = vector.shape_cast %151 : vector<1x4x4xbf16> to vector<4x4xbf16>
    %153 = arith.truncf %102 : vector<4x256xf32> to vector<4x256xbf16>
    %cst_87 = arith.constant dense<0.000000e+00> : vector<4x256xf32>
    %154 = tpu.matmul %152, %153, %cst_87 {dimension_numbers = #tpu.dot_dimension_numbers<[1], [0], [0], [1], [0, 0, 1, 1], [], []>} : vector<4x4xbf16>, vector<4x256xbf16>, vector<4x256xf32> -> vector<4x256xf32>
    %155 = arith.addf %150, %154 : vector<4x256xf32>
    %c8_88 = arith.constant 8 : index
    %c0_89 = arith.constant 0 : index
    %c0_90 = arith.constant 0 : index
    %156 = vector.load %arg4[%c8_88, %c0_89, %c0_90] : memref<9x4x4xbf16, #tpu.memory_space<vmem>>, vector<1x4x4xbf16>
    %157 = vector.shape_cast %156 : vector<1x4x4xbf16> to vector<4x4xbf16>
    %158 = arith.truncf %145 : vector<4x256xf32> to vector<4x256xbf16>
    %cst_91 = arith.constant dense<0.000000e+00> : vector<4x256xf32>
    %159 = tpu.matmul %157, %158, %cst_91 {dimension_numbers = #tpu.dot_dimension_numbers<[1], [0], [0], [1], [0, 0, 1, 1], [], []>} : vector<4x4xbf16>, vector<4x256xbf16>, vector<4x256xf32> -> vector<4x256xf32>
    %160 = arith.addf %155, %159 : vector<4x256xf32>
    %161 = vector.broadcast %98 : vector<4x1xf32> to vector<4x256xf32>
    %162 = arith.addf %160, %161 : vector<4x256xf32>
    %cst_92 = arith.constant dense<0.000000e+00> : vector<4xf32>
    %163 = vector.multi_reduction <add>, %162, %cst_92 [1] : vector<4x256xf32> to vector<4xf32>
    %164 = vector.shape_cast %163 : vector<4xf32> to vector<4x1xf32>
    %cst_93 = arith.constant 3.906250e-03 : f32
    %165 = vector.broadcast %cst_93 : f32 to vector<4x1xf32>
    %166 = arith.mulf %164, %165 : vector<4x1xf32>
    %167 = arith.mulf %162, %162 : vector<4x256xf32>
    %cst_94 = arith.constant dense<0.000000e+00> : vector<4xf32>
    %168 = vector.multi_reduction <add>, %167, %cst_94 [1] : vector<4x256xf32> to vector<4xf32>
    %169 = vector.shape_cast %168 : vector<4xf32> to vector<4x1xf32>
    %cst_95 = arith.constant 3.906250e-03 : f32
    %170 = vector.broadcast %cst_95 : f32 to vector<4x1xf32>
    %171 = arith.mulf %169, %170 : vector<4x1xf32>
    %172 = arith.mulf %166, %166 : vector<4x1xf32>
    %173 = arith.subf %171, %172 : vector<4x1xf32>
    %174 = vector.broadcast %166 : vector<4x1xf32> to vector<4x256xf32>
    %175 = arith.subf %162, %174 : vector<4x256xf32>
    %cst_96 = arith.constant 9.99999974E-6 : f32
    %176 = vector.broadcast %cst_96 : f32 to vector<4x1xf32>
    %177 = arith.addf %173, %176 : vector<4x1xf32>
    %178 = math.rsqrt %177 : vector<4x1xf32>
    %179 = vector.broadcast %178 : vector<4x1xf32> to vector<4x256xf32>
    %180 = arith.mulf %175, %179 : vector<4x256xf32>
    %181 = arith.addf %1, %180 : vector<4x256xf32>
    %c0_97 = arith.constant 0 : index
    %c0_98 = arith.constant 0 : index
    %c0_99 = arith.constant 0 : index
    %182 = vector.load %arg6[%c0_97, %c0_98, %c0_99] : memref<1x4x256xf32, #tpu.memory_space<vmem>>, vector<1x4x256xf32>
    %183 = vector.shape_cast %182 : vector<1x4x256xf32> to vector<4x256xf32>
    %184 = vector.shape_cast %181 : vector<4x256xf32> to vector<1x4x256xf32>
    tpu.vector_store %arg6[%c0_97, %c0_98, %c0_99], %184 {strides = array<i32>} : memref<1x4x256xf32, #tpu.memory_space<vmem>>, vector<1x4x256xf32>,
    return
  }
  func.func @transform_0(%arg0: i32) -> (i32, i32, i32) {
    %c0_i32 = arith.constant 0 : i32
    %c0_i32_0 = arith.constant 0 : i32
    %c0_i32_1 = arith.constant 0 : i32
    return %arg0, %c0_i32, %c0_i32_0 : i32, i32, i32
  }
  func.func @transform_1(%arg0: i32) -> (i32, i32, i32) {
    %c0_i32 = arith.constant 0 : i32
    %c0_i32_0 = arith.constant 0 : i32
    %c0_i32_1 = arith.constant 0 : i32
    %c0_i32_2 = arith.constant 0 : i32
    return %c0_i32, %c0_i32_0, %c0_i32_1 : i32, i32, i32
  }
  func.func @transform_2(%arg0: i32) -> (i32, i32) {
    %c0_i32 = arith.constant 0 : i32
    %c0_i32_0 = arith.constant 0 : i32
    %c0_i32_1 = arith.constant 0 : i32
    return %c0_i32, %c0_i32_0 : i32, i32
  }
  func.func @transform_3(%arg0: i32) -> (i32, i32, i32) {
    %c0_i32 = arith.constant 0 : i32
    %c0_i32_0 = arith.constant 0 : i32
    %c0_i32_1 = arith.constant 0 : i32
    %c0_i32_2 = arith.constant 0 : i32
    return %c0_i32, %c0_i32_0, %c0_i32_1 : i32, i32, i32
  }
  func.func @transform_4(%arg0: i32) -> (i32, i32) {
    %c0_i32 = arith.constant 0 : i32
    %c0_i32_0 = arith.constant 0 : i32
    %c0_i32_1 = arith.constant 0 : i32
    return %c0_i32, %c0_i32_0 : i32, i32
  }
  func.func @transform_5(%arg0: i32) -> (i32, i32, i32) {
    %c0_i32 = arith.constant 0 : i32
    %c0_i32_0 = arith.constant 0 : i32
    %c0_i32_1 = arith.constant 0 : i32
    return %arg0, %c0_i32, %c0_i32_0 : i32, i32, i32
  }
}

</mosaic_0001>

<llo_original>
// kernel: tpu_custom_call.1
$region0: #{tpu_custom_call.1}
  #allocation0 [shape = 'u32[]', space=smem, size = 0x4, offset = 0x4, fixed_abs, tag = 'smem constant byte address 0x4 - core index']
  #allocation1 [shape = 'u32[144,128]{1,0:T(1,128)}', space=vmem, size = 0x12000, scoped, tag = 'internal scratch']
  %s0 = inlined_call_operand.vmem [shape: f32[2,4,256], index: 0, kind: input, shape index: {}]
  %s1 = inlined_call_operand.vmem [shape: bf16[9,4,4], index: 1, kind: input, shape index: {}]
  %s2 = inlined_call_operand.vmem [shape: f32[4,1], index: 2, kind: input, shape index: {}]
  %s3 = inlined_call_operand.vmem [shape: bf16[9,4,4], index: 3, kind: input, shape index: {}]
  %s4 = inlined_call_operand.vmem [shape: f32[4,1], index: 4, kind: input, shape index: {}]
  %s5 = inlined_call_operand.hbm [shape: f32[2,4,256], index: 5, kind: output, shape index: {}]
  %s6 = sld [smem:[#allocation0]]
  $region53: #{tpu_custom_call.1} parent=0
    _
  %s8 = ssub.s32 1, %s6
  %s9 = scalar_select 0, %s8, %s6
  $region1: #{tpu_custom_call.1} parent=0
    #allocation2 [shape = 'u8[8192]{0}', space=vmem, size = 0x2000, scoped, tag = 'output window, operand 0']
    #allocation3 [shape = 's32[2]{0}', space=sflag, size = 0x8, scoped, tag = 'scoped memory for tpu_custom_call.1']
    %10 = vsyncpa [#allocation3], 0
    %s11 = scalar_lea.sflag [#allocation3], 1
    %12 = vsyncpa %s11, 0
    loop: start=0, step=1, limit=4
    $region2: #{tpu_custom_call.1} parent=1 // loop_pre_header
      _
    $region3: #{tpu_custom_call.1} parent=1 // loop_header
      %s14 = sphi 0, %s18
      %p15 = scmp.ge.s32.totalorder %s14, 4
      %s24 = sphi 0, %s26
      %s27 = sphi 0, %s24
      %s28 = sphi 0, %s27
      %s44 = sphi 0, %s28
      %s48 = sphi 0, %s48
      %s50 = sphi 0, %s48
      %s51 = sphi 0, %s50
      %s65 = sphi 0, %s51
      %s69 = sphi 0, %s69
      %s71 = sphi 0, %s69
      %s72 = sphi 0, %s71
      %s86 = sphi 0, %s72
      %s90 = sphi 0, %s90
      %s92 = sphi 0, %s90
      %s93 = sphi 0, %s92
      %s107 = sphi 0, %s93
      %s111 = sphi 0, %s111
      %s113 = sphi 0, %s111
      %s114 = sphi 0, %s113
      %s128 = sphi 0, %s114
      %s134 = sphi 0, %s136
      %s137 = sphi 0, %s134
      %s138 = sphi 0, %s137
      %s154 = sphi 0, %s138
    $region4: #{tpu_custom_call.1} parent=1 // loop_header_branch
      %17 = sbr.rel (%p15) target = $region8
    $region5: #{tpu_custom_call.1} parent=1 // loop_body
      %s19 = ssub.s32 %s14, 1
      %s20 = ssub.s32 %s14, 2
      %s21 = sadd.s32 %s14, 1
      %s22 = ssub.s32 %s14, %s21
      %p23 = scmp.eq.s32.totalorder %s22, 0
      %s25 = sadd.s32 %s24, 1
      %s26 = scalar_select %p23, %s24, %s25
      %p29 = pneg %p23
      %p30 = scmp.eq.s32.totalorder %s14, 1
      %p31 = por %p29, %p30
      %p32 = scmp.ne.s32.totalorder %s24, %s27
      %p33 = scmp.eq.s32.totalorder %s14, 0
      %p34 = por %p32, %p33
      %p35 = scmp.ne.s32.totalorder %s24, %s27
      %p36 = scmp.eq.s32.totalorder %s19, 1
      %p37 = por %p35, %p36
      %p38 = scmp.ne.s32.totalorder %s27, %s28
      %p39 = scmp.eq.s32.totalorder %s19, 0
      %p40 = por %p38, %p39
      %p41 = scmp.ne.s32.totalorder %s27, %s28
      %p42 = scmp.eq.s32.totalorder %s20, 1
      %p43 = por %p41, %p42
      %p45 = scmp.ne.s32.totalorder %s28, %s44
      %p46 = scmp.eq.s32.totalorder %s20, 0
      %p47 = por %p45, %p46
      %s49 = sadd.s32 %s48, 1
      %p52 = scmp.eq.s32.totalorder %s14, 1
      %p53 = scmp.ne.s32.totalorder %s48, %s50
      %p54 = scmp.eq.s32.totalorder %s14, 0
      %p55 = por %p53, %p54
      %p56 = scmp.ne.s32.totalorder %s48, %s50
      %p57 = scmp.eq.s32.totalorder %s19, 1
      %p58 = por %p56, %p57
      %p59 = scmp.ne.s32.totalorder %s50, %s51
      %p60 = scmp.eq.s32.totalorder %s19, 0
      %p61 = por %p59, %p60
      %p62 = scmp.ne.s32.totalorder %s50, %s51
      %p63 = scmp.eq.s32.totalorder %s20, 1
      %p64 = por %p62, %p63
      %p66 = scmp.ne.s32.totalorder %s51, %s65
      %p67 = scmp.eq.s32.totalorder %s20, 0
      %p68 = por %p66, %p67
      %s70 = sadd.s32 %s69, 1
      %p73 = scmp.eq.s32.totalorder %s14, 1
      %p74 = scmp.ne.s32.totalorder %s69, %s71
      %p75 = scmp.eq.s32.totalorder %s14, 0
      %p76 = por %p74, %p75
      %p77 = scmp.ne.s32.totalorder %s69, %s71
      %p78 = scmp.eq.s32.totalorder %s19, 1
      %p79 = por %p77, %p78
      %p80 = scmp.ne.s32.totalorder %s71, %s72
      %p81 = scmp.eq.s32.totalorder %s19, 0
      %p82 = por %p80, %p81
      %p83 = scmp.ne.s32.totalorder %s71, %s72
      %p84 = scmp.eq.s32.totalorder %s20, 1
      %p85 = por %p83, %p84
      %p87 = scmp.ne.s32.totalorder %s72, %s86
      %p88 = scmp.eq.s32.totalorder %s20, 0
      %p89 = por %p87, %p88
      %s91 = sadd.s32 %s90, 1
      %p94 = scmp.eq.s32.totalorder %s14, 1
      %p95 = scmp.ne.s32.totalorder %s90, %s92
      %p96 = scmp.eq.s32.totalorder %s14, 0
      %p97 = por %p95, %p96
      %p98 = scmp.ne.s32.totalorder %s90, %s92
      %p99 = scmp.eq.s32.totalorder %s19, 1
      %p100 = por %p98, %p99
      %p101 = scmp.ne.s32.totalorder %s92, %s93
      %p102 = scmp.eq.s32.totalorder %s19, 0
      %p103 = por %p101, %p102
      %p104 = scmp.ne.s32.totalorder %s92, %s93
      %p105 = scmp.eq.s32.totalorder %s20, 1
      %p106 = por %p104, %p105
      %p108 = scmp.ne.s32.totalorder %s93, %s107
      %p109 = scmp.eq.s32.totalorder %s20, 0
      %p110 = por %p108, %p109
      %s112 = sadd.s32 %s111, 1
      %p115 = scmp.eq.s32.totalorder %s14, 1
      %p116 = scmp.ne.s32.totalorder %s111, %s113
      %p117 = scmp.eq.s32.totalorder %s14, 0
      %p118 = por %p116, %p117
      %p119 = scmp.ne.s32.totalorder %s111, %s113
      %p120 = scmp.eq.s32.totalorder %s19, 1
      %p121 = por %p119, %p120
      %p122 = scmp.ne.s32.totalorder %s113, %s114
      %p123 = scmp.eq.s32.totalorder %s19, 0
      %p124 = por %p122, %p123
      %p125 = scmp.ne.s32.totalorder %s113, %s114
      %p126 = scmp.eq.s32.totalorder %s20, 1
      %p127 = por %p125, %p126
      %p129 = scmp.ne.s32.totalorder %s114, %s128
      %p130 = scmp.eq.s32.totalorder %s20, 0
      %p131 = por %p129, %p130
      %s132 = ssub.s32 %s14, %s21
      %p133 = scmp.eq.s32.totalorder %s132, 0
      %s135 = sadd.s32 %s134, 1
      %s136 = scalar_select %p133, %s134, %s135
      %p139 = pneg %p133
      %p140 = scmp.eq.s32.totalorder %s14, 1
      %p141 = por %p139, %p140
      %p142 = scmp.ne.s32.totalorder %s134, %s137
      %p143 = scmp.eq.s32.totalorder %s14, 0
      %p144 = por %p142, %p143
      %p145 = scmp.ne.s32.totalorder %s134, %s137
      %p146 = scmp.eq.s32.totalorder %s19, 1
      %p147 = por %p145, %p146
      %p148 = scmp.ne.s32.totalorder %s137, %s138
      %p149 = scmp.eq.s32.totalorder %s19, 0
      %p150 = por %p148, %p149
      %p151 = scmp.ne.s32.totalorder %s137, %s138
      %p152 = scmp.eq.s32.totalorder %s20, 1
      %p153 = por %p151, %p152
      %p155 = scmp.ne.s32.totalorder %s138, %s154
      %p156 = scmp.eq.s32.totalorder %s20, 0
      %p157 = por %p155, %p156
      %p158 = scmp.le.s32.totalorder 1, %s14
      %p159 = scmp.lt.s32.totalorder %s14, 3
      %p160 = pnand %p158, %p159
      %p161 = pneg %p160
      // Predicated region
      $region9: #{tpu_custom_call.1} parent=5 // pred_check
        _
      $region10: #{tpu_custom_call.1} parent=5 // pred_check_branch
        %163 = sbr.rel (%p160) target = $region12
      $region11: #{tpu_custom_call.1} parent=5 // pred_region
        %s164 = ssub.s32 %s14, 1
        // Predicated region
        $region13: #{tpu_custom_call.1} parent=11 // pred_check
          %p165 = pneg %p61
        $region14: #{tpu_custom_call.1} parent=11 // pred_check_branch
          %167 = sbr.rel (%p165) target = $region16
        $region15: #{tpu_custom_call.1} parent=11 // pred_region
          _
        $region16: #{tpu_custom_call.1} parent=11 // pred_fallthru
          _
        // Predicated region
        $region17: #{tpu_custom_call.1} parent=11 // pred_check
          %p168 = pneg %p82
        $region18: #{tpu_custom_call.1} parent=11 // pred_check_branch
          %170 = sbr.rel (%p168) target = $region20
        $region19: #{tpu_custom_call.1} parent=11 // pred_region
          _
        $region20: #{tpu_custom_call.1} parent=11 // pred_fallthru
          _
        // Predicated region
        $region21: #{tpu_custom_call.1} parent=11 // pred_check
          %p171 = pneg %p103
        $region22: #{tpu_custom_call.1} parent=11 // pred_check_branch
          %173 = sbr.rel (%p171) target = $region24
        $region23: #{tpu_custom_call.1} parent=11 // pred_region
          _
        $region24: #{tpu_custom_call.1} parent=11 // pred_fallthru
          _
        // Predicated region
        $region25: #{tpu_custom_call.1} parent=11 // pred_check
          %p174 = pneg %p124
        $region26: #{tpu_custom_call.1} parent=11 // pred_check_branch
          %176 = sbr.rel (%p174) target = $region28
        $region27: #{tpu_custom_call.1} parent=11 // pred_region
          _
        $region28: #{tpu_custom_call.1} parent=11 // pred_fallthru
          _
      $region12: #{tpu_custom_call.1} parent=5 // pred_fallthru
        _
      %p177 = scmp.lt.s32.totalorder %s14, 2
      // Predicated region
      $region29: #{tpu_custom_call.1} parent=5 // pred_check
        %p178 = pneg %p177
      $region30: #{tpu_custom_call.1} parent=5 // pred_check_branch
        %180 = sbr.rel (%p178) target = $region32
      $region31: #{tpu_custom_call.1} parent=5 // pred_region
        // Predicated region
        $region33: #{tpu_custom_call.1} parent=31 // pred_check
          %p181 = pneg %p34
        $region34: #{tpu_custom_call.1} parent=31 // pred_check_branch
          %183 = sbr.rel (%p181) target = $region36
        $region35: #{tpu_custom_call.1} parent=31 // pred_region
          %p184 = scmp.lt.s32.totalorder %s14, 1
          %s185 = scalar_select %p184, %s14, 1
          %s186 = smul.addr %s185, 2
          %s187 = smul.addr %s186, 4
          %s188 = scalar_lea.vmem %s0, %s187
        $region36: #{tpu_custom_call.1} parent=31 // pred_fallthru
          _
      $region32: #{tpu_custom_call.1} parent=5 // pred_fallthru
        _
      %p189 = scmp.le.s32.totalorder 1, %s14
      %p190 = scmp.lt.s32.totalorder %s14, 3
      %p191 = pnand %p189, %p190
      %p192 = pneg %p191
      // Predicated region
      $region37: #{tpu_custom_call.1} parent=5 // pred_check
        _
      $region38: #{tpu_custom_call.1} parent=5 // pred_check_branch
        %194 = sbr.rel (%p191) target = $region40
      $region39: #{tpu_custom_call.1} parent=5 // pred_region
        %s195 = ssub.s32 %s14, 1
        %p196 = scmp.lt.s32.totalorder %s19, 1
        %s197 = scalar_select %p196, %s19, 1
        %s198 = smul.addr %s197, 2
        %s199 = smul.addr %s198, 4
        %s200 = scalar_lea.vmem %s0, %s199
        %p201 = pneg %p40
        %p202 = pneg %p37
        %p203 = pneg %p61
        %p204 = pneg %p58
        %p205 = pneg %p82
        %p206 = pneg %p79
        %p207 = pneg %p103
        %p208 = pneg %p100
        %p209 = pneg %p124
        %p210 = pneg %p121
        %p211 = pneg %p150
        %p212 = pneg %p147
        %s213 = sand.u32 %s137, 1
        %s214 = scalar_lea.sflag [#allocation3], %s213
        %s215 = sand.u32 %s137, 1
        %s216 = smul.addr %s215, 8
        %s217 = scalar_lea.vmem [#allocation2], %s216
        %p218 = scmp.lt.s32.totalorder %s19, 1
        %s219 = scalar_select %p218, %s19, 1
        %s220 = smul.addr %s219, 2
        %s221 = smul.addr %s220, 4
        %s222 = scalar_lea.vmem %s0, %s221
        %v224 = vld [vmem:[%s222] sm:$0xff]
        %v225 = vlaneseq
        %v226 = vand.u32 %v225, 127
        %v227 = vadd.s32 %v226, 128
        %v228 = vand.u32 %v226, 15
        %v229 = vand.u32 %v227, 15
        %vm230 = vcmp.eq.s32.totalorder %v228, 0
        %vm231 = vcmp.eq.s32.totalorder %v229, 0
        %vm232 = vcmp.eq.s32.totalorder %v228, 15
        %vm233 = vcmp.eq.s32.totalorder %v229, 15
        %vm234 = vcmp.lt.s32.totalorder %v226, 16
        %vm235 = vcmp.lt.s32.totalorder %v227, 16
        %vm236 = vcmp.ge.s32.totalorder %v226, 240
        %vm237 = vcmp.ge.s32.totalorder %v227, 240
        %v238 = vld [vmem:[%s2] sm:$0xf]
        %v240 = vcombine.high %v224, %v224
        %242 = vrot.lane.b32.xlu0 %v224, 1
        %v243 = vpop.permute.xlu0 %242
        %244 = vrot.lane.b32.xlu0 %v240, 1
        %v245 = vpop.permute.xlu0 %244
        %vm246 = vcmp.lt.s32.totalorder %v226, 1
        %v247 = vsel %vm246, %v243, %v245
        %v248 = vsel %vm246, %v245, %v243
        %249 = vrot.lane.b32.xlu0 %v224, 127
        %v250 = vpop.permute.xlu0 %249
        %251 = vrot.lane.b32.xlu0 %v240, 127
        %v252 = vpop.permute.xlu0 %251
        %vm253 = vcmp.lt.s32.totalorder %v226, 127
        %v254 = vsel %vm253, %v250, %v252
        %v255 = vsel %vm253, %v252, %v250
        %v256 = vsel %vm230, %v254, %v248
        %v257 = vsel %vm231, %v255, %v247
        %v258 = vsel %vm232, %v248, %v254
        %v259 = vsel %vm233, %v247, %v255
        %260 = vrot.lane.b32.xlu0 %v256, 16
        %v261 = vpop.permute.xlu0 %260
        %262 = vrot.lane.b32.xlu0 %v257, 16
        %v263 = vpop.permute.xlu0 %262
        %v264 = vsel %vm234, %v261, %v263
        %v265 = vsel %vm234, %v263, %v261
        %266 = vrot.lane.b32.xlu0 %v256, 112
        %v267 = vpop.permute.xlu0 %266
        %268 = vrot.lane.b32.xlu0 %v257, 112
        %v269 = vpop.permute.xlu0 %268
        %vm270 = vcmp.lt.s32.totalorder %v226, 112
        %v271 = vsel %vm270, %v267, %v269
        %v272 = vsel %vm270, %v269, %v267
        %v273 = vsel %vm234, %v271, %v265
        %v274 = vsel %vm235, %v272, %v264
        %v275 = vsel %vm236, %v265, %v271
        %v276 = vsel %vm237, %v264, %v272
        %v277 = vld [vmem:[%s1] sm:$0x3]
        %v278 = vpack.c.bf16 %v273, %v273
        %v279 = vpack.c.bf16 %v274, %v274
        %s280 = scalar_lea.vmem %s1, 6
        %v281 = vld [vmem:[%s280] sm:$0x3]
        %v282 = vpack.c.bf16 %v256, %v256
        %v283 = vpack.c.bf16 %v257, %v257
        %vm284 = vcmask 31744
        %v286 = vsel %vm284, %v281, 0
        %vm288 = vcmask 1041408
        %v290 = vsel %vm288, %v282, 0
        %v293 = vsel %vm288, %v283, 0
        %295 = vmatprep.subr.bf16.mxu0 %v293
        %296 = vmatpush1.bf16.msra.mxu0 %v290
        %297 = vmatprep.subr.bf16.mxu0 0
        %298 = vmatpush1.bf16.msra.mxu0 0
        %299 = vmatprep.subr.bf16.mxu0 0
        %300 = vmatpush1.bf16.msra.mxu0 0
        %301 = vmatprep.subr.bf16.mxu0 0
        %302 = vmatpush1.bf16.msra.mxu0 0
        %303 = vmatprep.subr.bf16.mxu0 0
        %304 = vmatpush1.bf16.msra.mxu0 0
        %305 = vmatprep.subr.bf16.mxu0 0
        %306 = vmatpush1.bf16.msra.mxu0 0
        %307 = vmatprep.subr.bf16.mxu0 0
        %308 = vmatpush1.bf16.msra.mxu0 0
        %309 = vmatprep.subr.bf16.mxu0 0
        %310 = vmatpush1.bf16.msra.mxu0 0
        %311 = vmatprep.subr.bf16.mxu0 0
        %312 = vmatpush1.bf16.msra.mxu0 0
        %313 = vmatprep.subr.bf16.mxu0 0
        %314 = vmatpush1.bf16.msra.mxu0 0
        %315 = vmatprep.subr.bf16.mxu0 0
        %316 = vmatpush1.bf16.msra.mxu0 0
        %317 = vmatprep.subr.bf16.mxu0 0
        %318 = vmatpush1.bf16.msra.mxu0 0
        %319 = vmatprep.subr.bf16.mxu0 0
        %320 = vmatpush1.bf16.msra.mxu0 0
        %321 = vmatprep.subr.bf16.mxu0 0
        %322 = vmatpush1.bf16.msra.mxu0 0
        %323 = vmatprep.subr.bf16.mxu0 0
        %324 = vmatpush1.bf16.msra.mxu0 0
        %325 = vmatprep.subr.bf16.mxu0 0
        %326 = vmatpush1.bf16.msra.mxu0 0
        %327 = vmatprep.mubr.bf16.mxu0 0
        %328 = vmatmul.mubr.bf16.gmra.mrb[0].mxu0 %v286
        %v329 = vpop.f32.mrb[0].mxu0
        %v330 = vadd.f32 0.0, %v329
        %v331 = vpop.f32.mrb[0].mxu0
        %v332 = vadd.f32 0.0, %v331
        %v333 = vpop.f32.mrb[0].mxu0
        %v334 = vpop.f32.mrb[0].mxu0
        %335 = vdwg.mxu0
        %v337 = vsel %vm284, %v277, 0
        %v340 = vsel %vm288, %v278, 0
        %v343 = vsel %vm288, %v279, 0
        %345 = vmatprep.subr.bf16.mxu0 %v343
        %346 = vmatpush1.bf16.msra.mxu0 %v340
        %347 = vmatprep.subr.bf16.mxu0 0
        %348 = vmatpush1.bf16.msra.mxu0 0
        %349 = vmatprep.subr.bf16.mxu0 0
        %350 = vmatpush1.bf16.msra.mxu0 0
        %351 = vmatprep.subr.bf16.mxu0 0
        %352 = vmatpush1.bf16.msra.mxu0 0
        %353 = vmatprep.subr.bf16.mxu0 0
        %354 = vmatpush1.bf16.msra.mxu0 0
        %355 = vmatprep.subr.bf16.mxu0 0
        %356 = vmatpush1.bf16.msra.mxu0 0
        %357 = vmatprep.subr.bf16.mxu0 0
        %358 = vmatpush1.bf16.msra.mxu0 0
        %359 = vmatprep.subr.bf16.mxu0 0
        %360 = vmatpush1.bf16.msra.mxu0 0
        %361 = vmatprep.subr.bf16.mxu0 0
        %362 = vmatpush1.bf16.msra.mxu0 0
        %363 = vmatprep.subr.bf16.mxu0 0
        %364 = vmatpush1.bf16.msra.mxu0 0
        %365 = vmatprep.subr.bf16.mxu0 0
        %366 = vmatpush1.bf16.msra.mxu0 0
        %367 = vmatprep.subr.bf16.mxu0 0
        %368 = vmatpush1.bf16.msra.mxu0 0
        %369 = vmatprep.subr.bf16.mxu0 0
        %370 = vmatpush1.bf16.msra.mxu0 0
        %371 = vmatprep.subr.bf16.mxu0 0
        %372 = vmatpush1.bf16.msra.mxu0 0
        %373 = vmatprep.subr.bf16.mxu0 0
        %374 = vmatpush1.bf16.msra.mxu0 0
        %375 = vmatprep.subr.bf16.mxu0 0
        %376 = vmatpush1.bf16.msra.mxu0 0
        %377 = vmatprep.mubr.bf16.mxu0 0
        %378 = vmatmul.mubr.bf16.gmra.mrb[0].mxu0 %v337
        %v379 = vpop.f32.mrb[0].mxu0
        %v380 = vadd.f32 %v330, %v379
        %v381 = vpop.f32.mrb[0].mxu0
        %v382 = vadd.f32 %v332, %v381
        %v383 = vpop.f32.mrb[0].mxu0
        %v384 = vpop.f32.mrb[0].mxu0
        %385 = vdwg.mxu0
        %s386 = scalar_lea.vmem %s1, 12
        %v387 = vld [vmem:[%s386] sm:$0x3]
        %v388 = vpack.c.bf16 %v275, %v275
        %v389 = vpack.c.bf16 %v276, %v276
        %v391 = vsel %vm284, %v387, 0
        %v394 = vsel %vm288, %v388, 0
        %v397 = vsel %vm288, %v389, 0
        %399 = vmatprep.subr.bf16.mxu0 %v397
        %400 = vmatpush1.bf16.msra.mxu0 %v394
        %401 = vmatprep.subr.bf16.mxu0 0
        %402 = vmatpush1.bf16.msra.mxu0 0
        %403 = vmatprep.subr.bf16.mxu0 0
        %404 = vmatpush1.bf16.msra.mxu0 0
        %405 = vmatprep.subr.bf16.mxu0 0
        %406 = vmatpush1.bf16.msra.mxu0 0
        %407 = vmatprep.subr.bf16.mxu0 0
        %408 = vmatpush1.bf16.msra.mxu0 0
        %409 = vmatprep.subr.bf16.mxu0 0
        %410 = vmatpush1.bf16.msra.mxu0 0
        %411 = vmatprep.subr.bf16.mxu0 0
        %412 = vmatpush1.bf16.msra.mxu0 0
        %413 = vmatprep.subr.bf16.mxu0 0
        %414 = vmatpush1.bf16.msra.mxu0 0
        %415 = vmatprep.subr.bf16.mxu0 0
        %416 = vmatpush1.bf16.msra.mxu0 0
        %417 = vmatprep.subr.bf16.mxu0 0
        %418 = vmatpush1.bf16.msra.mxu0 0
        %419 = vmatprep.subr.bf16.mxu0 0
        %420 = vmatpush1.bf16.msra.mxu0 0
        %421 = vmatprep.subr.bf16.mxu0 0
        %422 = vmatpush1.bf16.msra.mxu0 0
        %423 = vmatprep.subr.bf16.mxu0 0
        %424 = vmatpush1.bf16.msra.mxu0 0
        %425 = vmatprep.subr.bf16.mxu0 0
        %426 = vmatpush1.bf16.msra.mxu0 0
        %427 = vmatprep.subr.bf16.mxu0 0
        %428 = vmatpush1.bf16.msra.mxu0 0
        %429 = vmatprep.subr.bf16.mxu0 0
        %430 = vmatpush1.bf16.msra.mxu0 0
        %431 = vmatprep.mubr.bf16.mxu0 0
        %432 = vmatmul.mubr.bf16.gmra.mrb[0].mxu0 %v391
        %v433 = vpop.f32.mrb[0].mxu0
        %v434 = vadd.f32 0.0, %v433
        %v435 = vpop.f32.mrb[0].mxu0
        %v436 = vadd.f32 0.0, %v435
        %v437 = vpop.f32.mrb[0].mxu0
        %v438 = vpop.f32.mrb[0].mxu0
        %439 = vdwg.mxu0
        %v440 = vadd.f32 %v380, %v434
        %v441 = vadd.f32 %v382, %v436
        %442 = vrot.lane.b32.xlu0 %v224, 16
        %v443 = vpop.permute.xlu0 %442
        %444 = vrot.lane.b32.xlu0 %v240, 16
        %v445 = vpop.permute.xlu0 %444
        %v446 = vsel %vm234, %v443, %v445
        %v447 = vsel %vm234, %v445, %v443
        %448 = vrot.lane.b32.xlu0 %v224, 112
        %v449 = vpop.permute.xlu0 %448
        %450 = vrot.lane.b32.xlu0 %v240, 112
        %v451 = vpop.permute.xlu0 %450
        %v452 = vsel %vm270, %v449, %v451
        %v453 = vsel %vm270, %v451, %v449
        %v454 = vsel %vm234, %v452, %v447
        %v455 = vsel %vm235, %v453, %v446
        %v456 = vsel %vm236, %v447, %v452
        %v457 = vsel %vm237, %v446, %v453
        %s458 = scalar_lea.vmem %s1, 2
        %v459 = vld [vmem:[%s458] sm:$0x3]
        %v460 = vpack.c.bf16 %v454, %v454
        %v461 = vpack.c.bf16 %v455, %v455
        %v463 = vsel %vm284, %v459, 0
        %v466 = vsel %vm288, %v460, 0
        %v469 = vsel %vm288, %v461, 0
        %471 = vmatprep.subr.bf16.mxu0 %v469
        %472 = vmatpush1.bf16.msra.mxu0 %v466
        %473 = vmatprep.subr.bf16.mxu0 0
        %474 = vmatpush1.bf16.msra.mxu0 0
        %475 = vmatprep.subr.bf16.mxu0 0
        %476 = vmatpush1.bf16.msra.mxu0 0
        %477 = vmatprep.subr.bf16.mxu0 0
        %478 = vmatpush1.bf16.msra.mxu0 0
        %479 = vmatprep.subr.bf16.mxu0 0
        %480 = vmatpush1.bf16.msra.mxu0 0
        %481 = vmatprep.subr.bf16.mxu0 0
        %482 = vmatpush1.bf16.msra.mxu0 0
        %483 = vmatprep.subr.bf16.mxu0 0
        %484 = vmatpush1.bf16.msra.mxu0 0
        %485 = vmatprep.subr.bf16.mxu0 0
        %486 = vmatpush1.bf16.msra.mxu0 0
        %487 = vmatprep.subr.bf16.mxu0 0
        %488 = vmatpush1.bf16.msra.mxu0 0
        %489 = vmatprep.subr.bf16.mxu0 0
        %490 = vmatpush1.bf16.msra.mxu0 0
        %491 = vmatprep.subr.bf16.mxu0 0
        %492 = vmatpush1.bf16.msra.mxu0 0
        %493 = vmatprep.subr.bf16.mxu0 0
        %494 = vmatpush1.bf16.msra.mxu0 0
        %495 = vmatprep.subr.bf16.mxu0 0
        %496 = vmatpush1.bf16.msra.mxu0 0
        %497 = vmatprep.subr.bf16.mxu0 0
        %498 = vmatpush1.bf16.msra.mxu0 0
        %499 = vmatprep.subr.bf16.mxu0 0
        %500 = vmatpush1.bf16.msra.mxu0 0
        %501 = vmatprep.subr.bf16.mxu0 0
        %502 = vmatpush1.bf16.msra.mxu0 0
        %503 = vmatprep.mubr.bf16.mxu0 0
        %504 = vmatmul.mubr.bf16.gmra.mrb[0].mxu0 %v463
        %v505 = vpop.f32.mrb[0].mxu0
        %v506 = vadd.f32 0.0, %v505
        %v507 = vpop.f32.mrb[0].mxu0
        %v508 = vadd.f32 0.0, %v507
        %v509 = vpop.f32.mrb[0].mxu0
        %v510 = vpop.f32.mrb[0].mxu0
        %511 = vdwg.mxu0
        %v512 = vadd.f32 %v440, %v506
        %v513 = vadd.f32 %v441, %v508
        %s514 = scalar_lea.vmem %s1, 8
        %v515 = vld [vmem:[%s514] sm:$0x3]
        %v516 = vpack.c.bf16 %v224, %v224
        %v517 = vpack.c.bf16 %v240, %v240
        %v519 = vsel %vm284, %v515, 0
        %v522 = vsel %vm288, %v516, 0
        %v525 = vsel %vm288, %v517, 0
        %527 = vmatprep.subr.bf16.mxu0 %v525
        %528 = vmatpush1.bf16.msra.mxu0 %v522
        %529 = vmatprep.subr.bf16.mxu0 0
        %530 = vmatpush1.bf16.msra.mxu0 0
        %531 = vmatprep.subr.bf16.mxu0 0
        %532 = vmatpush1.bf16.msra.mxu0 0
        %533 = vmatprep.subr.bf16.mxu0 0
        %534 = vmatpush1.bf16.msra.mxu0 0
        %535 = vmatprep.subr.bf16.mxu0 0
        %536 = vmatpush1.bf16.msra.mxu0 0
        %537 = vmatprep.subr.bf16.mxu0 0
        %538 = vmatpush1.bf16.msra.mxu0 0
        %539 = vmatprep.subr.bf16.mxu0 0
        %540 = vmatpush1.bf16.msra.mxu0 0
        %541 = vmatprep.subr.bf16.mxu0 0
        %542 = vmatpush1.bf16.msra.mxu0 0
        %543 = vmatprep.subr.bf16.mxu0 0
        %544 = vmatpush1.bf16.msra.mxu0 0
        %545 = vmatprep.subr.bf16.mxu0 0
        %546 = vmatpush1.bf16.msra.mxu0 0
        %547 = vmatprep.subr.bf16.mxu0 0
        %548 = vmatpush1.bf16.msra.mxu0 0
        %549 = vmatprep.subr.bf16.mxu0 0
        %550 = vmatpush1.bf16.msra.mxu0 0
        %551 = vmatprep.subr.bf16.mxu0 0
        %552 = vmatpush1.bf16.msra.mxu0 0
        %553 = vmatprep.subr.bf16.mxu0 0
        %554 = vmatpush1.bf16.msra.mxu0 0
        %555 = vmatprep.subr.bf16.mxu0 0
        %556 = vmatpush1.bf16.msra.mxu0 0
        %557 = vmatprep.subr.bf16.mxu0 0
        %558 = vmatpush1.bf16.msra.mxu0 0
        %559 = vmatprep.mubr.bf16.mxu0 0
        %560 = vmatmul.mubr.bf16.gmra.mrb[0].mxu0 %v519
        %v561 = vpop.f32.mrb[0].mxu0
        %v562 = vadd.f32 0.0, %v561
        %v563 = vpop.f32.mrb[0].mxu0
        %v564 = vadd.f32 0.0, %v563
        %v565 = vpop.f32.mrb[0].mxu0
        %v566 = vpop.f32.mrb[0].mxu0
        %567 = vdwg.mxu0
        %v568 = vadd.f32 %v512, %v562
        %v569 = vadd.f32 %v513, %v564
        %s570 = scalar_lea.vmem %s1, 14
        %v571 = vld [vmem:[%s570] sm:$0x3]
        %v572 = vpack.c.bf16 %v456, %v456
        %v573 = vpack.c.bf16 %v457, %v457
        %v575 = vsel %vm284, %v571, 0
        %v578 = vsel %vm288, %v572, 0
        %v581 = vsel %vm288, %v573, 0
        %583 = vmatprep.subr.bf16.mxu0 %v581
        %584 = vmatpush1.bf16.msra.mxu0 %v578
        %585 = vmatprep.subr.bf16.mxu0 0
        %586 = vmatpush1.bf16.msra.mxu0 0
        %587 = vmatprep.subr.bf16.mxu0 0
        %588 = vmatpush1.bf16.msra.mxu0 0
        %589 = vmatprep.subr.bf16.mxu0 0
        %590 = vmatpush1.bf16.msra.mxu0 0
        %591 = vmatprep.subr.bf16.mxu0 0
        %592 = vmatpush1.bf16.msra.mxu0 0
        %593 = vmatprep.subr.bf16.mxu0 0
        %594 = vmatpush1.bf16.msra.mxu0 0
        %595 = vmatprep.subr.bf16.mxu0 0
        %596 = vmatpush1.bf16.msra.mxu0 0
        %597 = vmatprep.subr.bf16.mxu0 0
        %598 = vmatpush1.bf16.msra.mxu0 0
        %599 = vmatprep.subr.bf16.mxu0 0
        %600 = vmatpush1.bf16.msra.mxu0 0
        %601 = vmatprep.subr.bf16.mxu0 0
        %602 = vmatpush1.bf16.msra.mxu0 0
        %603 = vmatprep.subr.bf16.mxu0 0
        %604 = vmatpush1.bf16.msra.mxu0 0
        %605 = vmatprep.subr.bf16.mxu0 0
        %606 = vmatpush1.bf16.msra.mxu0 0
        %607 = vmatprep.subr.bf16.mxu0 0
        %608 = vmatpush1.bf16.msra.mxu0 0
        %609 = vmatprep.subr.bf16.mxu0 0
        %610 = vmatpush1.bf16.msra.mxu0 0
        %611 = vmatprep.subr.bf16.mxu0 0
        %612 = vmatpush1.bf16.msra.mxu0 0
        %613 = vmatprep.subr.bf16.mxu0 0
        %614 = vmatpush1.bf16.msra.mxu0 0
        %615 = vmatprep.mubr.bf16.mxu0 0
        %616 = vmatmul.mubr.bf16.gmra.mrb[0].mxu0 %v575
        %v617 = vpop.f32.mrb[0].mxu0
        %v618 = vadd.f32 0.0, %v617
        %v619 = vpop.f32.mrb[0].mxu0
        %v620 = vadd.f32 0.0, %v619
        %v621 = vpop.f32.mrb[0].mxu0
        %v622 = vpop.f32.mrb[0].mxu0
        %623 = vdwg.mxu0
        %v624 = vadd.f32 %v568, %v618
        %v625 = vadd.f32 %v569, %v620
        %626 = vrot.lane.b32.xlu0 %v258, 16
        %v627 = vpop.permute.xlu0 %626
        %628 = vrot.lane.b32.xlu0 %v259, 16
        %v629 = vpop.permute.xlu0 %628
        %v630 = vsel %vm234, %v627, %v629
        %v631 = vsel %vm234, %v629, %v627
        %632 = vrot.lane.b32.xlu0 %v258, 112
        %v633 = vpop.permute.xlu0 %632
        %634 = vrot.lane.b32.xlu0 %v259, 112
        %v635 = vpop.permute.xlu0 %634
        %v636 = vsel %vm270, %v633, %v635
        %v637 = vsel %vm270, %v635, %v633
        %v638 = vsel %vm234, %v636, %v631
        %v639 = vsel %vm235, %v637, %v630
        %v640 = vsel %vm236, %v631, %v636
        %v641 = vsel %vm237, %v630, %v637
        %s642 = scalar_lea.vmem %s1, 4
        %v643 = vld [vmem:[%s642] sm:$0x3]
        %v644 = vpack.c.bf16 %v638, %v638
        %v645 = vpack.c.bf16 %v639, %v639
        %v647 = vsel %vm284, %v643, 0
        %v650 = vsel %vm288, %v644, 0
        %v653 = vsel %vm288, %v645, 0
        %655 = vmatprep.subr.bf16.mxu0 %v653
        %656 = vmatpush1.bf16.msra.mxu0 %v650
        %657 = vmatprep.subr.bf16.mxu0 0
        %658 = vmatpush1.bf16.msra.mxu0 0
        %659 = vmatprep.subr.bf16.mxu0 0
        %660 = vmatpush1.bf16.msra.mxu0 0
        %661 = vmatprep.subr.bf16.mxu0 0
        %662 = vmatpush1.bf16.msra.mxu0 0
        %663 = vmatprep.subr.bf16.mxu0 0
        %664 = vmatpush1.bf16.msra.mxu0 0
        %665 = vmatprep.subr.bf16.mxu0 0
        %666 = vmatpush1.bf16.msra.mxu0 0
        %667 = vmatprep.subr.bf16.mxu0 0
        %668 = vmatpush1.bf16.msra.mxu0 0
        %669 = vmatprep.subr.bf16.mxu0 0
        %670 = vmatpush1.bf16.msra.mxu0 0
        %671 = vmatprep.subr.bf16.mxu0 0
        %672 = vmatpush1.bf16.msra.mxu0 0
        %673 = vmatprep.subr.bf16.mxu0 0
        %674 = vmatpush1.bf16.msra.mxu0 0
        %675 = vmatprep.subr.bf16.mxu0 0
        %676 = vmatpush1.bf16.msra.mxu0 0
        %677 = vmatprep.subr.bf16.mxu0 0
        %678 = vmatpush1.bf16.msra.mxu0 0
        %679 = vmatprep.subr.bf16.mxu0 0
        %680 = vmatpush1.bf16.msra.mxu0 0
        %681 = vmatprep.subr.bf16.mxu0 0
        %682 = vmatpush1.bf16.msra.mxu0 0
        %683 = vmatprep.subr.bf16.mxu0 0
        %684 = vmatpush1.bf16.msra.mxu0 0
        %685 = vmatprep.subr.bf16.mxu0 0
        %686 = vmatpush1.bf16.msra.mxu0 0
        %687 = vmatprep.mubr.bf16.mxu0 0
        %688 = vmatmul.mubr.bf16.gmra.mrb[0].mxu0 %v647
        %v689 = vpop.f32.mrb[0].mxu0
        %v690 = vadd.f32 0.0, %v689
        %v691 = vpop.f32.mrb[0].mxu0
        %v692 = vadd.f32 0.0, %v691
        %v693 = vpop.f32.mrb[0].mxu0
        %v694 = vpop.f32.mrb[0].mxu0
        %695 = vdwg.mxu0
        %v696 = vadd.f32 %v624, %v690
        %v697 = vadd.f32 %v625, %v692
        %s698 = scalar_lea.vmem %s1, 10
        %v699 = vld [vmem:[%s698] sm:$0x3]
        %v700 = vpack.c.bf16 %v258, %v258
        %v701 = vpack.c.bf16 %v259, %v259
        %v703 = vsel %vm284, %v699, 0
        %v706 = vsel %vm288, %v700, 0
        %v709 = vsel %vm288, %v701, 0
        %711 = vmatprep.subr.bf16.mxu0 %v709
        %712 = vmatpush1.bf16.msra.mxu0 %v706
        %713 = vmatprep.subr.bf16.mxu0 0
        %714 = vmatpush1.bf16.msra.mxu0 0
        %715 = vmatprep.subr.bf16.mxu0 0
        %716 = vmatpush1.bf16.msra.mxu0 0
        %717 = vmatprep.subr.bf16.mxu0 0
        %718 = vmatpush1.bf16.msra.mxu0 0
        %719 = vmatprep.subr.bf16.mxu0 0
        %720 = vmatpush1.bf16.msra.mxu0 0
        %721 = vmatprep.subr.bf16.mxu0 0
        %722 = vmatpush1.bf16.msra.mxu0 0
        %723 = vmatprep.subr.bf16.mxu0 0
        %724 = vmatpush1.bf16.msra.mxu0 0
        %725 = vmatprep.subr.bf16.mxu0 0
        %726 = vmatpush1.bf16.msra.mxu0 0
        %727 = vmatprep.subr.bf16.mxu0 0
        %728 = vmatpush1.bf16.msra.mxu0 0
        %729 = vmatprep.subr.bf16.mxu0 0
        %730 = vmatpush1.bf16.msra.mxu0 0
        %731 = vmatprep.subr.bf16.mxu0 0
        %732 = vmatpush1.bf16.msra.mxu0 0
        %733 = vmatprep.subr.bf16.mxu0 0
        %734 = vmatpush1.bf16.msra.mxu0 0
        %735 = vmatprep.subr.bf16.mxu0 0
        %736 = vmatpush1.bf16.msra.mxu0 0
        %737 = vmatprep.subr.bf16.mxu0 0
        %738 = vmatpush1.bf16.msra.mxu0 0
        %739 = vmatprep.subr.bf16.mxu0 0
        %740 = vmatpush1.bf16.msra.mxu0 0
        %741 = vmatprep.subr.bf16.mxu0 0
        %742 = vmatpush1.bf16.msra.mxu0 0
        %743 = vmatprep.mubr.bf16.mxu0 0
        %744 = vmatmul.mubr.bf16.gmra.mrb[0].mxu0 %v703
        %v745 = vpop.f32.mrb[0].mxu0
        %v746 = vadd.f32 0.0, %v745
        %v747 = vpop.f32.mrb[0].mxu0
        %v748 = vadd.f32 0.0, %v747
        %v749 = vpop.f32.mrb[0].mxu0
        %v750 = vpop.f32.mrb[0].mxu0
        %751 = vdwg.mxu0
        %v752 = vadd.f32 %v696, %v746
        %v753 = vadd.f32 %v697, %v748
        %s754 = scalar_lea.vmem %s1, 16
        %v755 = vld [vmem:[%s754] sm:$0x3]
        %v756 = vpack.c.bf16 %v640, %v640
        %v757 = vpack.c.bf16 %v641, %v641
        %v759 = vsel %vm284, %v755, 0
        %v762 = vsel %vm288, %v756, 0
        %v765 = vsel %vm288, %v757, 0
        %767 = vmatprep.subr.bf16.mxu0 %v765
        %768 = vmatpush1.bf16.msra.mxu0 %v762
        %769 = vmatprep.subr.bf16.mxu0 0
        %770 = vmatpush1.bf16.msra.mxu0 0
        %771 = vmatprep.subr.bf16.mxu0 0
        %772 = vmatpush1.bf16.msra.mxu0 0
        %773 = vmatprep.subr.bf16.mxu0 0
        %774 = vmatpush1.bf16.msra.mxu0 0
        %775 = vmatprep.subr.bf16.mxu0 0
        %776 = vmatpush1.bf16.msra.mxu0 0
        %777 = vmatprep.subr.bf16.mxu0 0
        %778 = vmatpush1.bf16.msra.mxu0 0
        %779 = vmatprep.subr.bf16.mxu0 0
        %780 = vmatpush1.bf16.msra.mxu0 0
        %781 = vmatprep.subr.bf16.mxu0 0
        %782 = vmatpush1.bf16.msra.mxu0 0
        %783 = vmatprep.subr.bf16.mxu0 0
        %784 = vmatpush1.bf16.msra.mxu0 0
        %785 = vmatprep.subr.bf16.mxu0 0
        %786 = vmatpush1.bf16.msra.mxu0 0
        %787 = vmatprep.subr.bf16.mxu0 0
        %788 = vmatpush1.bf16.msra.mxu0 0
        %789 = vmatprep.subr.bf16.mxu0 0
        %790 = vmatpush1.bf16.msra.mxu0 0
        %791 = vmatprep.subr.bf16.mxu0 0
        %792 = vmatpush1.bf16.msra.mxu0 0
        %793 = vmatprep.subr.bf16.mxu0 0
        %794 = vmatpush1.bf16.msra.mxu0 0
        %795 = vmatprep.subr.bf16.mxu0 0
        %796 = vmatpush1.bf16.msra.mxu0 0
        %797 = vmatprep.subr.bf16.mxu0 0
        %798 = vmatpush1.bf16.msra.mxu0 0
        %799 = vmatprep.mubr.bf16.mxu0 0
        %800 = vmatmul.mubr.bf16.gmra.mrb[0].mxu0 %v759
        %v801 = vpop.f32.mrb[0].mxu0
        %v802 = vadd.f32 0.0, %v801
        %v803 = vpop.f32.mrb[0].mxu0
        %v804 = vadd.f32 0.0, %v803
        %v805 = vpop.f32.mrb[0].mxu0
        %v806 = vpop.f32.mrb[0].mxu0
        %807 = vdwg.mxu0
        %v808 = vadd.f32 %v752, %v802
        %v809 = vadd.f32 %v753, %v804
        %811 = vset.pattern.permute.xlu0 0
        %812 = vperm.xlu0 %811, %v238
        %v813 = vpop.permute.xlu0 %812
        %v815 = vadd.f32 %v808, %v813
        %v816 = vadd.f32 %v809, %v813
        %vm817 = vcmask 1043456
        %v818 = vsel %vm817, %v815, 0.0
        %v819 = vsel %vm817, %v816, 0.0
        %v820 = vadd.f32 %v818, %v819
        %821 = vadd.xlane.f32.xlu0 %v820
        %v822 = vpop.xlane.xlu0 %821
        %v823 = vmul.f32 %v822, 0.00390625
        %v824 = vmul.f32 %v815, %v815
        %v825 = vmul.f32 %v816, %v816
        %v826 = vsel %vm817, %v824, 0.0
        %v827 = vsel %vm817, %v825, 0.0
        %v828 = vadd.f32 %v826, %v827
        %829 = vadd.xlane.f32.xlu0 %v828
        %v830 = vpop.xlane.xlu0 %829
        %v831 = vmul.f32 %v830, 0.00390625
        %v832 = vmul.f32 %v823, %v823
        %v833 = vsub.f32 %v831, %v832
        %v834 = vsub.f32 %v815, %v823
        %v835 = vsub.f32 %v816, %v823
        %v836 = vadd.f32 %v833, 1e-05
        %v837 = vrsqrt.pop %v836
        %v838 = vmul.f32 %v834, %v837
        %v839 = vmul.f32 %v835, %v837
        %v840 = vmax.f32 %v838, 0.0
        %v841 = vmax.f32 %v839, 0.0
        %v842 = vld [vmem:[%s4] sm:$0xf]
        %843 = vrot.lane.b32.xlu0 %v840, 1
        %v844 = vpop.permute.xlu0 %843
        %845 = vrot.lane.b32.xlu0 %v841, 1
        %v846 = vpop.permute.xlu0 %845
        %v847 = vsel %vm246, %v844, %v846
        %v848 = vsel %vm246, %v846, %v844
        %849 = vrot.lane.b32.xlu0 %v840, 127
        %v850 = vpop.permute.xlu0 %849
        %851 = vrot.lane.b32.xlu0 %v841, 127
        %v852 = vpop.permute.xlu0 %851
        %v853 = vsel %vm253, %v850, %v852
        %v854 = vsel %vm253, %v852, %v850
        %v855 = vsel %vm230, %v853, %v848
        %v856 = vsel %vm231, %v854, %v847
        %v857 = vsel %vm232, %v848, %v853
        %v858 = vsel %vm233, %v847, %v854
        %859 = vrot.lane.b32.xlu0 %v855, 16
        %v860 = vpop.permute.xlu0 %859
        %861 = vrot.lane.b32.xlu0 %v856, 16
        %v862 = vpop.permute.xlu0 %861
        %v863 = vsel %vm234, %v860, %v862
        %v864 = vsel %vm234, %v862, %v860
        %865 = vrot.lane.b32.xlu0 %v855, 112
        %v866 = vpop.permute.xlu0 %865
        %867 = vrot.lane.b32.xlu0 %v856, 112
        %v868 = vpop.permute.xlu0 %867
        %v869 = vsel %vm270, %v866, %v868
        %v870 = vsel %vm270, %v868, %v866
        %v871 = vsel %vm234, %v869, %v864
        %v872 = vsel %vm235, %v870, %v863
        %v873 = vsel %vm236, %v864, %v869
        %v874 = vsel %vm237, %v863, %v870
        %v875 = vld [vmem:[%s3] sm:$0x3]
        %v876 = vpack.c.bf16 %v871, %v871
        %v877 = vpack.c.bf16 %v872, %v872
        %s878 = scalar_lea.vmem %s3, 6
        %v879 = vld [vmem:[%s878] sm:$0x3]
        %v880 = vpack.c.bf16 %v855, %v855
        %v881 = vpack.c.bf16 %v856, %v856
        %v883 = vsel %vm284, %v879, 0
        %v886 = vsel %vm288, %v880, 0
        %v889 = vsel %vm288, %v881, 0
        %891 = vmatprep.subr.bf16.mxu0 %v889
        %892 = vmatpush1.bf16.msra.mxu0 %v886
        %893 = vmatprep.subr.bf16.mxu0 0
        %894 = vmatpush1.bf16.msra.mxu0 0
        %895 = vmatprep.subr.bf16.mxu0 0
        %896 = vmatpush1.bf16.msra.mxu0 0
        %897 = vmatprep.subr.bf16.mxu0 0
        %898 = vmatpush1.bf16.msra.mxu0 0
        %899 = vmatprep.subr.bf16.mxu0 0
        %900 = vmatpush1.bf16.msra.mxu0 0
        %901 = vmatprep.subr.bf16.mxu0 0
        %902 = vmatpush1.bf16.msra.mxu0 0
        %903 = vmatprep.subr.bf16.mxu0 0
        %904 = vmatpush1.bf16.msra.mxu0 0
        %905 = vmatprep.subr.bf16.mxu0 0
        %906 = vmatpush1.bf16.msra.mxu0 0
        %907 = vmatprep.subr.bf16.mxu0 0
        %908 = vmatpush1.bf16.msra.mxu0 0
        %909 = vmatprep.subr.bf16.mxu0 0
        %910 = vmatpush1.bf16.msra.mxu0 0
        %911 = vmatprep.subr.bf16.mxu0 0
        %912 = vmatpush1.bf16.msra.mxu0 0
        %913 = vmatprep.subr.bf16.mxu0 0
        %914 = vmatpush1.bf16.msra.mxu0 0
        %915 = vmatprep.subr.bf16.mxu0 0
        %916 = vmatpush1.bf16.msra.mxu0 0
        %917 = vmatprep.subr.bf16.mxu0 0
        %918 = vmatpush1.bf16.msra.mxu0 0
        %919 = vmatprep.subr.bf16.mxu0 0
        %920 = vmatpush1.bf16.msra.mxu0 0
        %921 = vmatprep.subr.bf16.mxu0 0
        %922 = vmatpush1.bf16.msra.mxu0 0
        %923 = vmatprep.mubr.bf16.mxu0 0
        %924 = vmatmul.mubr.bf16.gmra.mrb[0].mxu0 %v883
        %v925 = vpop.f32.mrb[0].mxu0
        %v926 = vadd.f32 0.0, %v925
        %v927 = vpop.f32.mrb[0].mxu0
        %v928 = vadd.f32 0.0, %v927
        %v929 = vpop.f32.mrb[0].mxu0
        %v930 = vpop.f32.mrb[0].mxu0
        %931 = vdwg.mxu0
        %v933 = vsel %vm284, %v875, 0
        %v936 = vsel %vm288, %v876, 0
        %v939 = vsel %vm288, %v877, 0
        %941 = vmatprep.subr.bf16.mxu0 %v939
        %942 = vmatpush1.bf16.msra.mxu0 %v936
        %943 = vmatprep.subr.bf16.mxu0 0
        %944 = vmatpush1.bf16.msra.mxu0 0
        %945 = vmatprep.subr.bf16.mxu0 0
        %946 = vmatpush1.bf16.msra.mxu0 0
        %947 = vmatprep.subr.bf16.mxu0 0
        %948 = vmatpush1.bf16.msra.mxu0 0
        %949 = vmatprep.subr.bf16.mxu0 0
        %950 = vmatpush1.bf16.msra.mxu0 0
        %951 = vmatprep.subr.bf16.mxu0 0
        %952 = vmatpush1.bf16.msra.mxu0 0
        %953 = vmatprep.subr.bf16.mxu0 0
        %954 = vmatpush1.bf16.msra.mxu0 0
        %955 = vmatprep.subr.bf16.mxu0 0
        %956 = vmatpush1.bf16.msra.mxu0 0
        %957 = vmatprep.subr.bf16.mxu0 0
        %958 = vmatpush1.bf16.msra.mxu0 0
        %959 = vmatprep.subr.bf16.mxu0 0
        %960 = vmatpush1.bf16.msra.mxu0 0
        %961 = vmatprep.subr.bf16.mxu0 0
        %962 = vmatpush1.bf16.msra.mxu0 0
        %963 = vmatprep.subr.bf16.mxu0 0
        %964 = vmatpush1.bf16.msra.mxu0 0
        %965 = vmatprep.subr.bf16.mxu0 0
        %966 = vmatpush1.bf16.msra.mxu0 0
        %967 = vmatprep.subr.bf16.mxu0 0
        %968 = vmatpush1.bf16.msra.mxu0 0
        %969 = vmatprep.subr.bf16.mxu0 0
        %970 = vmatpush1.bf16.msra.mxu0 0
        %971 = vmatprep.subr.bf16.mxu0 0
        %972 = vmatpush1.bf16.msra.mxu0 0
        %973 = vmatprep.mubr.bf16.mxu0 0
        %974 = vmatmul.mubr.bf16.gmra.mrb[0].mxu0 %v933
        %v975 = vpop.f32.mrb[0].mxu0
        %v976 = vadd.f32 %v926, %v975
        %v977 = vpop.f32.mrb[0].mxu0
        %v978 = vadd.f32 %v928, %v977
        %v979 = vpop.f32.mrb[0].mxu0
        %v980 = vpop.f32.mrb[0].mxu0
        %981 = vdwg.mxu0
        %s982 = scalar_lea.vmem %s3, 12
        %v983 = vld [vmem:[%s982] sm:$0x3]
        %v984 = vpack.c.bf16 %v873, %v873
        %v985 = vpack.c.bf16 %v874, %v874
        %v987 = vsel %vm284, %v983, 0
        %v990 = vsel %vm288, %v984, 0
        %v993 = vsel %vm288, %v985, 0
        %995 = vmatprep.subr.bf16.mxu0 %v993
        %996 = vmatpush1.bf16.msra.mxu0 %v990
        %997 = vmatprep.subr.bf16.mxu0 0
        %998 = vmatpush1.bf16.msra.mxu0 0
        %999 = vmatprep.subr.bf16.mxu0 0
        %1000 = vmatpush1.bf16.msra.mxu0 0
        %1001 = vmatprep.subr.bf16.mxu0 0
        %1002 = vmatpush1.bf16.msra.mxu0 0
        %1003 = vmatprep.subr.bf16.mxu0 0
        %1004 = vmatpush1.bf16.msra.mxu0 0
        %1005 = vmatprep.subr.bf16.mxu0 0
        %1006 = vmatpush1.bf16.msra.mxu0 0
        %1007 = vmatprep.subr.bf16.mxu0 0
        %1008 = vmatpush1.bf16.msra.mxu0 0
        %1009 = vmatprep.subr.bf16.mxu0 0
        %1010 = vmatpush1.bf16.msra.mxu0 0
        %1011 = vmatprep.subr.bf16.mxu0 0
        %1012 = vmatpush1.bf16.msra.mxu0 0
        %1013 = vmatprep.subr.bf16.mxu0 0
        %1014 = vmatpush1.bf16.msra.mxu0 0
        %1015 = vmatprep.subr.bf16.mxu0 0
        %1016 = vmatpush1.bf16.msra.mxu0 0
        %1017 = vmatprep.subr.bf16.mxu0 0
        %1018 = vmatpush1.bf16.msra.mxu0 0
        %1019 = vmatprep.subr.bf16.mxu0 0
        %1020 = vmatpush1.bf16.msra.mxu0 0
        %1021 = vmatprep.subr.bf16.mxu0 0
        %1022 = vmatpush1.bf16.msra.mxu0 0
        %1023 = vmatprep.subr.bf16.mxu0 0
        %1024 = vmatpush1.bf16.msra.mxu0 0
        %1025 = vmatprep.subr.bf16.mxu0 0
        %1026 = vmatpush1.bf16.msra.mxu0 0
        %1027 = vmatprep.mubr.bf16.mxu0 0
        %1028 = vmatmul.mubr.bf16.gmra.mrb[0].mxu0 %v987
        %v1029 = vpop.f32.mrb[0].mxu0
        %v1030 = vadd.f32 0.0, %v1029
        %v1031 = vpop.f32.mrb[0].mxu0
        %v1032 = vadd.f32 0.0, %v1031
        %v1033 = vpop.f32.mrb[0].mxu0
        %v1034 = vpop.f32.mrb[0].mxu0
        %1035 = vdwg.mxu0
        %v1036 = vadd.f32 %v976, %v1030
        %v1037 = vadd.f32 %v978, %v1032
        %1038 = vrot.lane.b32.xlu0 %v840, 16
        %v1039 = vpop.permute.xlu0 %1038
        %1040 = vrot.lane.b32.xlu0 %v841, 16
        %v1041 = vpop.permute.xlu0 %1040
        %v1042 = vsel %vm234, %v1039, %v1041
        %v1043 = vsel %vm234, %v1041, %v1039
        %1044 = vrot.lane.b32.xlu0 %v840, 112
        %v1045 = vpop.permute.xlu0 %1044
        %1046 = vrot.lane.b32.xlu0 %v841, 112
        %v1047 = vpop.permute.xlu0 %1046
        %v1048 = vsel %vm270, %v1045, %v1047
        %v1049 = vsel %vm270, %v1047, %v1045
        %v1050 = vsel %vm234, %v1048, %v1043
        %v1051 = vsel %vm235, %v1049, %v1042
        %v1052 = vsel %vm236, %v1043, %v1048
        %v1053 = vsel %vm237, %v1042, %v1049
        %s1054 = scalar_lea.vmem %s3, 2
        %v1055 = vld [vmem:[%s1054] sm:$0x3]
        %v1056 = vpack.c.bf16 %v1050, %v1050
        %v1057 = vpack.c.bf16 %v1051, %v1051
        %v1059 = vsel %vm284, %v1055, 0
        %v1062 = vsel %vm288, %v1056, 0
        %v1065 = vsel %vm288, %v1057, 0
        %1067 = vmatprep.subr.bf16.mxu0 %v1065
        %1068 = vmatpush1.bf16.msra.mxu0 %v1062
        %1069 = vmatprep.subr.bf16.mxu0 0
        %1070 = vmatpush1.bf16.msra.mxu0 0
        %1071 = vmatprep.subr.bf16.mxu0 0
        %1072 = vmatpush1.bf16.msra.mxu0 0
        %1073 = vmatprep.subr.bf16.mxu0 0
        %1074 = vmatpush1.bf16.msra.mxu0 0
        %1075 = vmatprep.subr.bf16.mxu0 0
        %1076 = vmatpush1.bf16.msra.mxu0 0
        %1077 = vmatprep.subr.bf16.mxu0 0
        %1078 = vmatpush1.bf16.msra.mxu0 0
        %1079 = vmatprep.subr.bf16.mxu0 0
        %1080 = vmatpush1.bf16.msra.mxu0 0
        %1081 = vmatprep.subr.bf16.mxu0 0
        %1082 = vmatpush1.bf16.msra.mxu0 0
        %1083 = vmatprep.subr.bf16.mxu0 0
        %1084 = vmatpush1.bf16.msra.mxu0 0
        %1085 = vmatprep.subr.bf16.mxu0 0
        %1086 = vmatpush1.bf16.msra.mxu0 0
        %1087 = vmatprep.subr.bf16.mxu0 0
        %1088 = vmatpush1.bf16.msra.mxu0 0
        %1089 = vmatprep.subr.bf16.mxu0 0
        %1090 = vmatpush1.bf16.msra.mxu0 0
        %1091 = vmatprep.subr.bf16.mxu0 0
        %1092 = vmatpush1.bf16.msra.mxu0 0
        %1093 = vmatprep.subr.bf16.mxu0 0
        %1094 = vmatpush1.bf16.msra.mxu0 0
        %1095 = vmatprep.subr.bf16.mxu0 0
        %1096 = vmatpush1.bf16.msra.mxu0 0
        %1097 = vmatprep.subr.bf16.mxu0 0
        %1098 = vmatpush1.bf16.msra.mxu0 0
        %1099 = vmatprep.mubr.bf16.mxu0 0
        %1100 = vmatmul.mubr.bf16.gmra.mrb[0].mxu0 %v1059
        %v1101 = vpop.f32.mrb[0].mxu0
        %v1102 = vadd.f32 0.0, %v1101
        %v1103 = vpop.f32.mrb[0].mxu0
        %v1104 = vadd.f32 0.0, %v1103
        %v1105 = vpop.f32.mrb[0].mxu0
        %v1106 = vpop.f32.mrb[0].mxu0
        %1107 = vdwg.mxu0
        %v1108 = vadd.f32 %v1036, %v1102
        %v1109 = vadd.f32 %v1037, %v1104
        %s1110 = scalar_lea.vmem %s3, 8
        %v1111 = vld [vmem:[%s1110] sm:$0x3]
        %v1112 = vpack.c.bf16 %v840, %v840
        %v1113 = vpack.c.bf16 %v841, %v841
        %v1115 = vsel %vm284, %v1111, 0
        %v1118 = vsel %vm288, %v1112, 0
        %v1121 = vsel %vm288, %v1113, 0
        %1123 = vmatprep.subr.bf16.mxu0 %v1121
        %1124 = vmatpush1.bf16.msra.mxu0 %v1118
        %1125 = vmatprep.subr.bf16.mxu0 0
        %1126 = vmatpush1.bf16.msra.mxu0 0
        %1127 = vmatprep.subr.bf16.mxu0 0
        %1128 = vmatpush1.bf16.msra.mxu0 0
        %1129 = vmatprep.subr.bf16.mxu0 0
        %1130 = vmatpush1.bf16.msra.mxu0 0
        %1131 = vmatprep.subr.bf16.mxu0 0
        %1132 = vmatpush1.bf16.msra.mxu0 0
        %1133 = vmatprep.subr.bf16.mxu0 0
        %1134 = vmatpush1.bf16.msra.mxu0 0
        %1135 = vmatprep.subr.bf16.mxu0 0
        %1136 = vmatpush1.bf16.msra.mxu0 0
        %1137 = vmatprep.subr.bf16.mxu0 0
        %1138 = vmatpush1.bf16.msra.mxu0 0
        %1139 = vmatprep.subr.bf16.mxu0 0
        %1140 = vmatpush1.bf16.msra.mxu0 0
        %1141 = vmatprep.subr.bf16.mxu0 0
        %1142 = vmatpush1.bf16.msra.mxu0 0
        %1143 = vmatprep.subr.bf16.mxu0 0
        %1144 = vmatpush1.bf16.msra.mxu0 0
        %1145 = vmatprep.subr.bf16.mxu0 0
        %1146 = vmatpush1.bf16.msra.mxu0 0
        %1147 = vmatprep.subr.bf16.mxu0 0
        %1148 = vmatpush1.bf16.msra.mxu0 0
        %1149 = vmatprep.subr.bf16.mxu0 0
        %1150 = vmatpush1.bf16.msra.mxu0 0
        %1151 = vmatprep.subr.bf16.mxu0 0
        %1152 = vmatpush1.bf16.msra.mxu0 0
        %1153 = vmatprep.subr.bf16.mxu0 0
        %1154 = vmatpush1.bf16.msra.mxu0 0
        %1155 = vmatprep.mubr.bf16.mxu0 0
        %1156 = vmatmul.mubr.bf16.gmra.mrb[0].mxu0 %v1115
        %v1157 = vpop.f32.mrb[0].mxu0
        %v1158 = vadd.f32 0.0, %v1157
        %v1159 = vpop.f32.mrb[0].mxu0
        %v1160 = vadd.f32 0.0, %v1159
        %v1161 = vpop.f32.mrb[0].mxu0
        %v1162 = vpop.f32.mrb[0].mxu0
        %1163 = vdwg.mxu0
        %v1164 = vadd.f32 %v1108, %v1158
        %v1165 = vadd.f32 %v1109, %v1160
        %s1166 = scalar_lea.vmem %s3, 14
        %v1167 = vld [vmem:[%s1166] sm:$0x3]
        %v1168 = vpack.c.bf16 %v1052, %v1052
        %v1169 = vpack.c.bf16 %v1053, %v1053
        %v1171 = vsel %vm284, %v1167, 0
        %v1174 = vsel %vm288, %v1168, 0
        %v1177 = vsel %vm288, %v1169, 0
        %1179 = vmatprep.subr.bf16.mxu0 %v1177
        %1180 = vmatpush1.bf16.msra.mxu0 %v1174
        %1181 = vmatprep.subr.bf16.mxu0 0
        %1182 = vmatpush1.bf16.msra.mxu0 0
        %1183 = vmatprep.subr.bf16.mxu0 0
        %1184 = vmatpush1.bf16.msra.mxu0 0
        %1185 = vmatprep.subr.bf16.mxu0 0
        %1186 = vmatpush1.bf16.msra.mxu0 0
        %1187 = vmatprep.subr.bf16.mxu0 0
        %1188 = vmatpush1.bf16.msra.mxu0 0
        %1189 = vmatprep.subr.bf16.mxu0 0
        %1190 = vmatpush1.bf16.msra.mxu0 0
        %1191 = vmatprep.subr.bf16.mxu0 0
        %1192 = vmatpush1.bf16.msra.mxu0 0
        %1193 = vmatprep.subr.bf16.mxu0 0
        %1194 = vmatpush1.bf16.msra.mxu0 0
        %1195 = vmatprep.subr.bf16.mxu0 0
        %1196 = vmatpush1.bf16.msra.mxu0 0
        %1197 = vmatprep.subr.bf16.mxu0 0
        %1198 = vmatpush1.bf16.msra.mxu0 0
        %1199 = vmatprep.subr.bf16.mxu0 0
        %1200 = vmatpush1.bf16.msra.mxu0 0
        %1201 = vmatprep.subr.bf16.mxu0 0
        %1202 = vmatpush1.bf16.msra.mxu0 0
        %1203 = vmatprep.subr.bf16.mxu0 0
        %1204 = vmatpush1.bf16.msra.mxu0 0
        %1205 = vmatprep.subr.bf16.mxu0 0
        %1206 = vmatpush1.bf16.msra.mxu0 0
        %1207 = vmatprep.subr.bf16.mxu0 0
        %1208 = vmatpush1.bf16.msra.mxu0 0
        %1209 = vmatprep.subr.bf16.mxu0 0
        %1210 = vmatpush1.bf16.msra.mxu0 0
        %1211 = vmatprep.mubr.bf16.mxu0 0
        %1212 = vmatmul.mubr.bf16.gmra.mrb[0].mxu0 %v1171
        %v1213 = vpop.f32.mrb[0].mxu0
        %v1214 = vadd.f32 0.0, %v1213
        %v1215 = vpop.f32.mrb[0].mxu0
        %v1216 = vadd.f32 0.0, %v1215
        %v1217 = vpop.f32.mrb[0].mxu0
        %v1218 = vpop.f32.mrb[0].mxu0
        %1219 = vdwg.mxu0
        %v1220 = vadd.f32 %v1164, %v1214
        %v1221 = vadd.f32 %v1165, %v1216
        %1222 = vrot.lane.b32.xlu0 %v857, 16
        %v1223 = vpop.permute.xlu0 %1222
        %1224 = vrot.lane.b32.xlu0 %v858, 16
        %v1225 = vpop.permute.xlu0 %1224
        %v1226 = vsel %vm234, %v1223, %v1225
        %v1227 = vsel %vm234, %v1225, %v1223
        %1228 = vrot.lane.b32.xlu0 %v857, 112
        %v1229 = vpop.permute.xlu0 %1228
        %1230 = vrot.lane.b32.xlu0 %v858, 112
        %v1231 = vpop.permute.xlu0 %1230
        %v1232 = vsel %vm270, %v1229, %v1231
        %v1233 = vsel %vm270, %v1231, %v1229
        %v1234 = vsel %vm234, %v1232, %v1227
        %v1235 = vsel %vm235, %v1233, %v1226
        %v1236 = vsel %vm236, %v1227, %v1232
        %v1237 = vsel %vm237, %v1226, %v1233
        %s1238 = scalar_lea.vmem %s3, 4
        %v1239 = vld [vmem:[%s1238] sm:$0x3]
        %v1240 = vpack.c.bf16 %v1234, %v1234
        %v1241 = vpack.c.bf16 %v1235, %v1235
        %v1243 = vsel %vm284, %v1239, 0
        %v1246 = vsel %vm288, %v1240, 0
        %v1249 = vsel %vm288, %v1241, 0
        %1251 = vmatprep.subr.bf16.mxu0 %v1249
        %1252 = vmatpush1.bf16.msra.mxu0 %v1246
        %1253 = vmatprep.subr.bf16.mxu0 0
        %1254 = vmatpush1.bf16.msra.mxu0 0
        %1255 = vmatprep.subr.bf16.mxu0 0
        %1256 = vmatpush1.bf16.msra.mxu0 0
        %1257 = vmatprep.subr.bf16.mxu0 0
        %1258 = vmatpush1.bf16.msra.mxu0 0
        %1259 = vmatprep.subr.bf16.mxu0 0
        %1260 = vmatpush1.bf16.msra.mxu0 0
        %1261 = vmatprep.subr.bf16.mxu0 0
        %1262 = vmatpush1.bf16.msra.mxu0 0
        %1263 = vmatprep.subr.bf16.mxu0 0
        %1264 = vmatpush1.bf16.msra.mxu0 0
        %1265 = vmatprep.subr.bf16.mxu0 0
        %1266 = vmatpush1.bf16.msra.mxu0 0
        %1267 = vmatprep.subr.bf16.mxu0 0
        %1268 = vmatpush1.bf16.msra.mxu0 0
        %1269 = vmatprep.subr.bf16.mxu0 0
        %1270 = vmatpush1.bf16.msra.mxu0 0
        %1271 = vmatprep.subr.bf16.mxu0 0
        %1272 = vmatpush1.bf16.msra.mxu0 0
        %1273 = vmatprep.subr.bf16.mxu0 0
        %1274 = vmatpush1.bf16.msra.mxu0 0
        %1275 = vmatprep.subr.bf16.mxu0 0
        %1276 = vmatpush1.bf16.msra.mxu0 0
        %1277 = vmatprep.subr.bf16.mxu0 0
        %1278 = vmatpush1.bf16.msra.mxu0 0
        %1279 = vmatprep.subr.bf16.mxu0 0
        %1280 = vmatpush1.bf16.msra.mxu0 0
        %1281 = vmatprep.subr.bf16.mxu0 0
        %1282 = vmatpush1.bf16.msra.mxu0 0
        %1283 = vmatprep.mubr.bf16.mxu0 0
        %1284 = vmatmul.mubr.bf16.gmra.mrb[0].mxu0 %v1243
        %v1285 = vpop.f32.mrb[0].mxu0
        %v1286 = vadd.f32 0.0, %v1285
        %v1287 = vpop.f32.mrb[0].mxu0
        %v1288 = vadd.f32 0.0, %v1287
        %v1289 = vpop.f32.mrb[0].mxu0
        %v1290 = vpop.f32.mrb[0].mxu0
        %1291 = vdwg.mxu0
        %v1292 = vadd.f32 %v1220, %v1286
        %v1293 = vadd.f32 %v1221, %v1288
        %s1294 = scalar_lea.vmem %s3, 10
        %v1295 = vld [vmem:[%s1294] sm:$0x3]
        %v1296 = vpack.c.bf16 %v857, %v857
        %v1297 = vpack.c.bf16 %v858, %v858
        %v1299 = vsel %vm284, %v1295, 0
        %v1302 = vsel %vm288, %v1296, 0
        %v1305 = vsel %vm288, %v1297, 0
        %1307 = vmatprep.subr.bf16.mxu0 %v1305
        %1308 = vmatpush1.bf16.msra.mxu0 %v1302
        %1309 = vmatprep.subr.bf16.mxu0 0
        %1310 = vmatpush1.bf16.msra.mxu0 0
        %1311 = vmatprep.subr.bf16.mxu0 0
        %1312 = vmatpush1.bf16.msra.mxu0 0
        %1313 = vmatprep.subr.bf16.mxu0 0
        %1314 = vmatpush1.bf16.msra.mxu0 0
        %1315 = vmatprep.subr.bf16.mxu0 0
        %1316 = vmatpush1.bf16.msra.mxu0 0
        %1317 = vmatprep.subr.bf16.mxu0 0
        %1318 = vmatpush1.bf16.msra.mxu0 0
        %1319 = vmatprep.subr.bf16.mxu0 0
        %1320 = vmatpush1.bf16.msra.mxu0 0
        %1321 = vmatprep.subr.bf16.mxu0 0
        %1322 = vmatpush1.bf16.msra.mxu0 0
        %1323 = vmatprep.subr.bf16.mxu0 0
        %1324 = vmatpush1.bf16.msra.mxu0 0
        %1325 = vmatprep.subr.bf16.mxu0 0
        %1326 = vmatpush1.bf16.msra.mxu0 0
        %1327 = vmatprep.subr.bf16.mxu0 0
        %1328 = vmatpush1.bf16.msra.mxu0 0
        %1329 = vmatprep.subr.bf16.mxu0 0
        %1330 = vmatpush1.bf16.msra.mxu0 0
        %1331 = vmatprep.subr.bf16.mxu0 0
        %1332 = vmatpush1.bf16.msra.mxu0 0
        %1333 = vmatprep.subr.bf16.mxu0 0
        %1334 = vmatpush1.bf16.msra.mxu0 0
        %1335 = vmatprep.subr.bf16.mxu0 0
        %1336 = vmatpush1.bf16.msra.mxu0 0
        %1337 = vmatprep.subr.bf16.mxu0 0
        %1338 = vmatpush1.bf16.msra.mxu0 0
        %1339 = vmatprep.mubr.bf16.mxu0 0
        %1340 = vmatmul.mubr.bf16.gmra.mrb[0].mxu0 %v1299
        %v1341 = vpop.f32.mrb[0].mxu0
        %v1342 = vadd.f32 0.0, %v1341
        %v1343 = vpop.f32.mrb[0].mxu0
        %v1344 = vadd.f32 0.0, %v1343
        %v1345 = vpop.f32.mrb[0].mxu0
        %v1346 = vpop.f32.mrb[0].mxu0
        %1347 = vdwg.mxu0
        %v1348 = vadd.f32 %v1292, %v1342
        %v1349 = vadd.f32 %v1293, %v1344
        %s1350 = scalar_lea.vmem %s3, 16
        %v1351 = vld [vmem:[%s1350] sm:$0x3]
        %v1352 = vpack.c.bf16 %v1236, %v1236
        %v1353 = vpack.c.bf16 %v1237, %v1237
        %v1355 = vsel %vm284, %v1351, 0
        %v1358 = vsel %vm288, %v1352, 0
        %v1361 = vsel %vm288, %v1353, 0
        %1363 = vmatprep.subr.bf16.mxu0 %v1361
        %1364 = vmatpush1.bf16.msra.mxu0 %v1358
        %1365 = vmatprep.subr.bf16.mxu0 0
        %1366 = vmatpush1.bf16.msra.mxu0 0
        %1367 = vmatprep.subr.bf16.mxu0 0
        %1368 = vmatpush1.bf16.msra.mxu0 0
        %1369 = vmatprep.subr.bf16.mxu0 0
        %1370 = vmatpush1.bf16.msra.mxu0 0
        %1371 = vmatprep.subr.bf16.mxu0 0
        %1372 = vmatpush1.bf16.msra.mxu0 0
        %1373 = vmatprep.subr.bf16.mxu0 0
        %1374 = vmatpush1.bf16.msra.mxu0 0
        %1375 = vmatprep.subr.bf16.mxu0 0
        %1376 = vmatpush1.bf16.msra.mxu0 0
        %1377 = vmatprep.subr.bf16.mxu0 0
        %1378 = vmatpush1.bf16.msra.mxu0 0
        %1379 = vmatprep.subr.bf16.mxu0 0
        %1380 = vmatpush1.bf16.msra.mxu0 0
        %1381 = vmatprep.subr.bf16.mxu0 0
        %1382 = vmatpush1.bf16.msra.mxu0 0
        %1383 = vmatprep.subr.bf16.mxu0 0
        %1384 = vmatpush1.bf16.msra.mxu0 0
        %1385 = vmatprep.subr.bf16.mxu0 0
        %1386 = vmatpush1.bf16.msra.mxu0 0
        %1387 = vmatprep.subr.bf16.mxu0 0
        %1388 = vmatpush1.bf16.msra.mxu0 0
        %1389 = vmatprep.subr.bf16.mxu0 0
        %1390 = vmatpush1.bf16.msra.mxu0 0
        %1391 = vmatprep.subr.bf16.mxu0 0
        %1392 = vmatpush1.bf16.msra.mxu0 0
        %1393 = vmatprep.subr.bf16.mxu0 0
        %1394 = vmatpush1.bf16.msra.mxu0 0
        %1395 = vmatprep.mubr.bf16.mxu0 0
        %1396 = vmatmul.mubr.bf16.gmra.mrb[0].mxu0 %v1355
        %v1397 = vpop.f32.mrb[0].mxu0
        %v1398 = vadd.f32 0.0, %v1397
        %v1399 = vpop.f32.mrb[0].mxu0
        %v1400 = vadd.f32 0.0, %v1399
        %v1401 = vpop.f32.mrb[0].mxu0
        %v1402 = vpop.f32.mrb[0].mxu0
        %1403 = vdwg.mxu0
        %v1404 = vadd.f32 %v1348, %v1398
        %v1405 = vadd.f32 %v1349, %v1400
        %1407 = vset.pattern.permute.xlu0 0
        %1408 = vperm.xlu0 %1407, %v842
        %v1409 = vpop.permute.xlu0 %1408
        %v1411 = vadd.f32 %v1404, %v1409
        %v1412 = vadd.f32 %v1405, %v1409
        %v1413 = vsel %vm817, %v1411, 0.0
        %v1414 = vsel %vm817, %v1412, 0.0
        %v1415 = vadd.f32 %v1413, %v1414
        %1416 = vadd.xlane.f32.xlu0 %v1415
        %v1417 = vpop.xlane.xlu0 %1416
        %v1418 = vmul.f32 %v1417, 0.00390625
        %v1419 = vmul.f32 %v1411, %v1411
        %v1420 = vmul.f32 %v1412, %v1412
        %v1421 = vsel %vm817, %v1419, 0.0
        %v1422 = vsel %vm817, %v1420, 0.0
        %v1423 = vadd.f32 %v1421, %v1422
        %1424 = vadd.xlane.f32.xlu0 %v1423
        %v1425 = vpop.xlane.xlu0 %1424
        %v1426 = vmul.f32 %v1425, 0.00390625
        %v1427 = vmul.f32 %v1418, %v1418
        %v1428 = vsub.f32 %v1426, %v1427
        %v1429 = vsub.f32 %v1411, %v1418
        %v1430 = vsub.f32 %v1412, %v1418
        %v1431 = vadd.f32 %v1428, 1e-05
        %v1432 = vrsqrt.pop %v1431
        %v1433 = vmul.f32 %v1429, %v1432
        %v1434 = vmul.f32 %v1430, %v1432
        %v1437 = vcombine.low %v1433, %v1434
        %v1439 = vadd.f32 %v224, %v1437
        %1440 = vst [vmem:[%s217] sm:$0xff] %v1439
        %s1441 = sand.u32 %s137, 1
        %s1442 = scalar_lea.sflag [#allocation3], %s1441
        %s1443 = sand.u32 %s137, 1
        %s1444 = smul.addr %s1443, 8
        %s1445 = scalar_lea.vmem [#allocation2], %s1444
        // Predicated region
        $region41: #{tpu_custom_call.1} parent=39 // pred_check
          %p1446 = pneg %p147
        $region42: #{tpu_custom_call.1} parent=39 // pred_check_branch
          %1448 = sbr.rel (%p1446) target = $region44
        $region43: #{tpu_custom_call.1} parent=39 // pred_region
          %s1450 = ssub.s32 128, 128
          %1451 = vsyncadd %s1442, %s1450
          %s1452 = smul.addr %s19, 2
          %s1453 = smul.addr %s1452, 64
          %s1454 = scalar_lea.hbm %s5, %s1453
          %s1456 = sshll.u32 %s1445, 4
          %s1457 = int_to_ptr.vmem [resolvable:$true] %s1456
          %1459 = dma.vmem_to_hbm [thread:$0]  %s1457, 128, %s1454, %s1442
        $region44: #{tpu_custom_call.1} parent=39 // pred_fallthru
          _
      $region40: #{tpu_custom_call.1} parent=5 // pred_fallthru
        _
      %p1460 = scmp.le.s32.totalorder 2, %s14
      // Predicated region
      $region45: #{tpu_custom_call.1} parent=5 // pred_check
        %p1461 = pneg %p1460
      $region46: #{tpu_custom_call.1} parent=5 // pred_check_branch
        %1463 = sbr.rel (%p1461) target = $region48
      $region47: #{tpu_custom_call.1} parent=5 // pred_region
        %s1464 = ssub.s32 %s14, 2
        // Predicated region
        $region49: #{tpu_custom_call.1} parent=47 // pred_check
          %p1465 = pneg %p153
        $region50: #{tpu_custom_call.1} parent=47 // pred_check_branch
          %1467 = sbr.rel (%p1465) target = $region52
        $region51: #{tpu_custom_call.1} parent=47 // pred_region
          %s1468 = sand.u32 %s138, 1
          %s1469 = scalar_lea.sflag [#allocation3], %s1468
          %s1470 = sand.u32 %s138, 1
          %s1471 = smul.addr %s1470, 8
          %s1472 = scalar_lea.vmem [#allocation2], %s1471
          %1473 = dma.done %s1469, 128
        $region52: #{tpu_custom_call.1} parent=47 // pred_fallthru
          _
      $region48: #{tpu_custom_call.1} parent=5 // pred_fallthru
        _
    $region6: #{tpu_custom_call.1} parent=1 // loop_footer
      %s18 = sadd.s32 1, %s14
    $region7: #{tpu_custom_call.1} parent=1 // loop_footer_branch
      %13 = sbr.rel target = $region3
    $region8: #{tpu_custom_call.1} parent=1 // loop_exit
      _
    %1474 = vsyncpa [#allocation3], 1
    %s1475 = scalar_lea.sflag [#allocation3], 1
    %1476 = vsyncpa %s1475, 1

</llo_original>
